<compile_context>
chip_gen: v6e
topology: v6e:2x2x1
jax: 0.10.0
libtpu: 0.0.40
codegen_flags: <defaults>
</compile_context>

<pallas_src>
import jax
import jax.numpy as jnp
from jax.experimental import pallas as pl
from jax.experimental.pallas import tpu as pltpu

IN_FEATURES = 512  # fixed by the module: Linear(512, embed_size)


def _round_tile(embed_size, tile_n):
    """Largest multiple of 128 that is <= tile_n and <= lane-padded embed_size."""
    lanes = pl.cdiv(embed_size, 128) * 128
    tn = min(tile_n, lanes)
    tn = max(128, (tn // 128) * 128)
    return tn


def prepare_embedding_params(w, b, *, tile_n=1024, weight_dtype=jnp.bfloat16):
    """One-time (parameter-load-time) weight prep — keep OUT of the per-call path.

    w: (E, 512) PyTorch Linear weight, b: (E,) bias.
    Returns:
      w_tiles: (n_tiles, 512, tn) `weight_dtype`, contiguous per E-tile,
      b_row:   (1, n_tiles * tn)  f32 (zero-padded),
      E:       original embed_size.
    Use weight_dtype=jnp.float32 if bit-faithful f32 numerics are required.
    """
    E, K = w.shape
    assert K == IN_FEATURES, f"expected (E, {IN_FEATURES}) weight, got {w.shape}"
    tn = _round_tile(E, tile_n)
    e_pad = pl.cdiv(E, tn) * tn
    n_tiles = e_pad // tn

    w_t = jnp.asarray(w).T.astype(weight_dtype)          # (512, E)
    b_row = jnp.asarray(b, jnp.float32).reshape(1, E)    # (1, E)
    if e_pad != E:
        w_t = jnp.pad(w_t, ((0, 0), (0, e_pad - E)))
        b_row = jnp.pad(b_row, ((0, 0), (0, e_pad - E)))

    # Pre-tile so each (512, tn) weight block is contiguous in HBM.
    w_tiles = w_t.reshape(IN_FEATURES, n_tiles, tn).transpose(1, 0, 2)
    return w_tiles, b_row, E


def embedding_kernel(x_ref, w_ref, b_ref, o_ref):
    """One E-tile: fused ReLU + (B,512)@(512,tn) MXU matmul + bias."""
    tn = o_ref.shape[-1]
    j = pl.program_id(0)

    x = jnp.maximum(x_ref[...], 0.0)          # VPU elementwise ReLU (f32)
    x = x.astype(w_ref.dtype)                 # bf16 for the MXU's native path
    acc = jnp.dot(x, w_ref[...],              # MXU matmul, f32 accumulate
                  preferred_element_type=jnp.float32)

    off = pl.multiple_of(j * tn, 128)         # resident bias, sliced in-kernel
    bias = b_ref[:, pl.ds(off, tn)]           # (1, tn), broadcasts over rows
    o_ref[...] = (acc + bias).astype(o_ref.dtype)


def embedding_layer(x_nchw, w_tiles, b_row, embed_size):
    """Forward pass.

    x_nchw:  (B, 512, 1, 1) f32
    w_tiles: (n_tiles, 512, tn) prepared weight (see prepare_embedding_params)
    b_row:   (1, n_tiles * tn) f32
    Returns (B, embed_size) f32.
    """
    B = x_nchw.shape[0]
    n_tiles, K, tn = w_tiles.shape
    e_pad = n_tiles * tn
    x2d = x_nchw.reshape(B, IN_FEATURES)       # squeeze(-1).squeeze(-1)

    wbytes = jnp.dtype(w_tiles.dtype).itemsize
    vmem_bytes = (2 * K * tn * wbytes          # weight tile, double-buffered
                  + B * K * 4                  # x block (resident, f32)
                  + 2 * B * tn * 4             # out tile, double-buffered
                  + e_pad * 4                  # resident bias
                  + (2 << 20))                 # slack
    # Cap safely below v7x's 64 MiB physical VMEM (v5e/v6e: 128 MiB, unaffected).
    vmem_bytes = int(min(max(vmem_bytes, 8 << 20), 48 << 20))

    cost = pl.CostEstimate(
        flops=2 * B * K * e_pad,
        transcendentals=0,
        bytes_accessed=(x2d.size * 4 + w_tiles.size * wbytes
                        + b_row.size * 4 + B * e_pad * 4),
    )

    out = pl.pallas_call(
        embedding_kernel,
        out_shape=jax.ShapeDtypeStruct((B, e_pad), jnp.float32),
        grid_spec=pltpu.PrefetchScalarGridSpec(
            num_scalar_prefetch=0,
            grid=(n_tiles,),
            in_specs=[
                pl.BlockSpec((B, K), lambda j: (0, 0)),          # x: resident
                pl.BlockSpec((None, K, tn), lambda j: (j, 0, 0)),  # weight: contiguous tile stream
                pl.BlockSpec((1, e_pad), lambda j: (0, 0)),      # bias: resident, no per-step DMA
            ],
            out_specs=pl.BlockSpec((B, tn), lambda j: (0, j)),   # lane-dense output tile
        ),
        compiler_params=pltpu.CompilerParams(
            dimension_semantics=("parallel",),                   # E-tiles independent (2 TCs on v7x)
            vmem_limit_bytes=vmem_bytes,
        ),
        cost_estimate=cost,
    )(x2d, w_tiles, b_row)

    return out[:, :embed_size]


if __name__ == "__main__":
    key = jax.random.PRNGKey(0)
    k_x, k_w, k_b = jax.random.split(key, 3)

    B = 8          # batch (multiple of 8 sublanes)
    EMBED = 2048   # embed_size -> grid=(2,) at the default 1024-wide E-tile

    # Deterministic "parameters" (PyTorch Linear: weight (EMBED, 512), bias (EMBED,))
    bound = 1.0 / jnp.sqrt(IN_FEATURES)
    w = jax.random.uniform(k_w, (EMBED, IN_FEATURES), jnp.float32, -bound, bound)
    b = jax.random.uniform(k_b, (EMBED,), jnp.float32, -bound, bound)

    # Example input, NCHW with trailing 1x1 spatial dims (as the forward implies)
    x = jax.random.normal(k_x, (B, IN_FEATURES, 1, 1), jnp.float32)

    # One-off weight preparation (parameter-load time), then the hot-path call.
    w_tiles, b_row, E = prepare_embedding_params(w, b)   # tile_n defaults to 1024
    out = embedding_layer(x, w_tiles, b_row, E)
    out = jax.block_until_ready(out)

    # Reference 1: exactly what the kernel computes (bf16 inputs, f32 accumulate).
    xr = jnp.maximum(x.reshape(B, IN_FEATURES), 0.0).astype(jnp.bfloat16)
    wr = w.T.astype(jnp.bfloat16)
    ref_bf16 = jnp.dot(xr, wr, preferred_element_type=jnp.float32) + b
    # Reference 2: full-f32 PyTorch-equivalent math (loose tolerance for bf16 weights).
    ref_f32 = jnp.maximum(x.reshape(B, IN_FEATURES), 0.0) @ w.T + b

    assert out.shape == (B, EMBED)
    assert jnp.allclose(out, ref_bf16, atol=2e-3, rtol=2e-3)
    assert jnp.allclose(out, ref_f32, atol=5e-2, rtol=5e-2)

    print("KERNEL_OK")
</pallas_src>

<mosaic_0001>
module attributes {stable_mosaic.version = 11 : i64} {
  func.func @embedding_kernel(%arg0: i32, %arg1: memref<8x512xf32, #tpu.memory_space<vmem>>, %arg2: memref<1x512x1024xbf16, #tpu.memory_space<vmem>>, %arg3: memref<1x2048xf32, #tpu.memory_space<vmem>>, %arg4: memref<8x1024xf32, #tpu.memory_space<vmem>>) attributes {dimension_semantics = [#tpu.dimension_semantics<parallel>], iteration_bounds = array<i64: 2>, scalar_prefetch = 0 : i64, scratch_operands = 0 : i64, tpu.core_type = #tpu.core_type<tc>, window_params = [{pipeline_mode = #tpu.pipeline_mode<synchronous>, transform_indices = @transform_0, window_bounds = array<i64: 8, 512>}, {transform_indices = @transform_1, window_bounds = array<i64: 1, 512, 1024>}, {pipeline_mode = #tpu.pipeline_mode<synchronous>, transform_indices = @transform_2, window_bounds = array<i64: 1, 2048>}, {transform_indices = @transform_3, window_bounds = array<i64: 8, 1024>}]} {
    %c0 = arith.constant 0 : index
    %c0_0 = arith.constant 0 : index
    %0 = vector.load %arg1[%c0, %c0_0] : memref<8x512xf32, #tpu.memory_space<vmem>>, vector<8x512xf32>
    %cst = arith.constant 0.000000e+00 : f32
    %1 = vector.broadcast %cst : f32 to vector<8x512xf32>
    %2 = arith.maximumf %0, %1 : vector<8x512xf32>
    %3 = arith.truncf %2 : vector<8x512xf32> to vector<8x512xbf16>
    %c0_1 = arith.constant 0 : index
    %c0_2 = arith.constant 0 : index
    %c0_3 = arith.constant 0 : index
    %4 = vector.load %arg2[%c0_1, %c0_2, %c0_3] : memref<1x512x1024xbf16, #tpu.memory_space<vmem>>, vector<1x512x1024xbf16>
    %5 = vector.shape_cast %4 : vector<1x512x1024xbf16> to vector<512x1024xbf16>
    %cst_4 = arith.constant dense<0.000000e+00> : vector<8x1024xf32>
    %6 = tpu.matmul %3, %5, %cst_4 {dimension_numbers = #tpu.dot_dimension_numbers<[1], [0], [0], [1], [0, 0, 1, 1], [], []>} : vector<8x512xbf16>, vector<512x1024xbf16>, vector<8x1024xf32> -> vector<8x1024xf32>
    %c1024_i32 = arith.constant 1024 : i32
    %7 = arith.muli %arg0, %c1024_i32 : i32
    %8 = tpu.assume_multiple %7, 128 : i32
    %c0_5 = arith.constant 0 : index
    %9 = arith.index_cast %8 : i32 to index
    %10 = vector.load %arg3[%c0_5, %9] : memref<1x2048xf32, #tpu.memory_space<vmem>>, vector<1x1024xf32>
    %11 = vector.broadcast %10 : vector<1x1024xf32> to vector<8x1024xf32>
    %12 = arith.addf %6, %11 : vector<8x1024xf32>
    %c0_6 = arith.constant 0 : index
    %c0_7 = arith.constant 0 : index
    %13 = vector.load %arg4[%c0_6, %c0_7] : memref<8x1024xf32, #tpu.memory_space<vmem>>, vector<8x1024xf32>
    tpu.vector_store %arg4[%c0_6, %c0_7], %12 {strides = array<i32>} : memref<8x1024xf32, #tpu.memory_space<vmem>>, vector<8x1024xf32>,
    return
  }
  func.func @transform_0(%arg0: i32) -> (i32, i32) {
    %c0_i32 = arith.constant 0 : i32
    %c0_i32_0 = arith.constant 0 : i32
    %c0_i32_1 = arith.constant 0 : i32
    return %c0_i32, %c0_i32_0 : i32, i32
  }
  func.func @transform_1(%arg0: i32) -> (i32, i32, i32) {
    %c0_i32 = arith.constant 0 : i32
    %c0_i32_0 = arith.constant 0 : i32
    %c0_i32_1 = arith.constant 0 : i32
    return %arg0, %c0_i32, %c0_i32_0 : i32, i32, i32
  }
  func.func @transform_2(%arg0: i32) -> (i32, i32) {
    %c0_i32 = arith.constant 0 : i32
    %c0_i32_0 = arith.constant 0 : i32
    %c0_i32_1 = arith.constant 0 : i32
    return %c0_i32, %c0_i32_0 : i32, i32
  }
  func.func @transform_3(%arg0: i32) -> (i32, i32) {
    %c0_i32 = arith.constant 0 : i32
    %c0_i32_0 = arith.constant 0 : i32
    return %c0_i32, %arg0 : i32, i32
  }
}

</mosaic_0001>

<llo_original>
// kernel: tpu_custom_call.1
$region0: #{tpu_custom_call.1}
  #allocation0 [shape = 'u32[]', space=smem, size = 0x4, offset = 0x4, fixed_abs, tag = 'smem constant byte address 0x4 - core index']
  #allocation1 [shape = 'u32[144,128]{1,0:T(1,128)}', space=vmem, size = 0x12000, scoped, tag = 'internal scratch']
  %s0 = inlined_call_operand.hbm [shape: f32[8,512], index: 0, kind: input, shape index: {}]
  %s1 = inlined_call_operand.hbm [shape: bf16[2,512,1024], index: 1, kind: input, shape index: {}]
  %s2 = inlined_call_operand.hbm [shape: f32[1,2048], index: 2, kind: input, shape index: {}]
  %s3 = inlined_call_operand.hbm [shape: f32[8,2048], index: 3, kind: output, shape index: {}]
  %s4 = sld [smem:[#allocation0]]
  $region57: #{tpu_custom_call.1} parent=0
    _
  %s6 = ssub.s32 1, %s4
  %s7 = scalar_select 0, %s6, %s4
  $region1: #{tpu_custom_call.1} parent=0
    #allocation2 [shape = 'u8[16384]{0}', space=vmem, size = 0x4000, scoped, tag = 'input window, operand 0, single buffered']
    #allocation3 [shape = 's32[2]{0}', space=sflag, size = 0x8, scoped, tag = 'scoped memory for tpu_custom_call.1']
    #allocation4 [shape = 's32[2]{0}', space=sflag, size = 0x8, scoped, tag = 'scoped memory for tpu_custom_call.1']
    #allocation5 [shape = 'u8[2097152]{0}', space=vmem, size = 0x200000, scoped, tag = 'input window, operand 1']
    #allocation6 [shape = 's32[2]{0}', space=sflag, size = 0x8, scoped, tag = 'scoped memory for tpu_custom_call.1']
    #allocation7 [shape = 'u8[8192]{0}', space=vmem, size = 0x2000, scoped, tag = 'input window, operand 2, single buffered']
    #allocation8 [shape = 'u8[65536]{0}', space=vmem, size = 0x10000, scoped, tag = 'output window, operand 0']
    %8 = vsyncpa [#allocation3], 0
    %9 = vsyncpa [#allocation6], 0
    %s10 = scalar_lea.sflag [#allocation6], 1
    %11 = vsyncpa %s10, 0
    %12 = vsyncpa [#allocation4], 0
    %s13 = scalar_lea.sflag [#allocation4], 1
    %14 = vsyncpa %s13, 0
    loop: start=0, step=1, limit=4
    $region2: #{tpu_custom_call.1} parent=1 // loop_pre_header
      _
    $region3: #{tpu_custom_call.1} parent=1 // loop_header
      %s16 = sphi 0, %s20
      %p17 = scmp.ge.s32.totalorder %s16, 4
      %s24 = sphi 0, %s24
      %s26 = sphi 0, %s24
      %s27 = sphi 0, %s26
      %s41 = sphi 0, %s27
      %s47 = sphi 0, %s49
      %s50 = sphi 0, %s47
      %s51 = sphi 0, %s50
      %s67 = sphi 0, %s51
      %s71 = sphi 0, %s71
      %s73 = sphi 0, %s71
      %s74 = sphi 0, %s73
      %s88 = sphi 0, %s74
      %s94 = sphi 0, %s96
      %s97 = sphi 0, %s94
      %s98 = sphi 0, %s97
      %s114 = sphi 0, %s98
    $region4: #{tpu_custom_call.1} parent=1 // loop_header_branch
      %19 = sbr.rel (%p17) target = $region8
    $region5: #{tpu_custom_call.1} parent=1 // loop_body
      %s21 = ssub.s32 %s16, 1
      %s22 = ssub.s32 %s16, 2
      %s23 = sadd.s32 %s16, 1
      %s25 = sadd.s32 %s24, 1
      %p28 = scmp.eq.s32.totalorder %s16, 1
      %p29 = scmp.ne.s32.totalorder %s24, %s26
      %p30 = scmp.eq.s32.totalorder %s16, 0
      %p31 = por %p29, %p30
      %p32 = scmp.ne.s32.totalorder %s24, %s26
      %p33 = scmp.eq.s32.totalorder %s21, 1
      %p34 = por %p32, %p33
      %p35 = scmp.ne.s32.totalorder %s26, %s27
      %p36 = scmp.eq.s32.totalorder %s21, 0
      %p37 = por %p35, %p36
      %p38 = scmp.ne.s32.totalorder %s26, %s27
      %p39 = scmp.eq.s32.totalorder %s22, 1
      %p40 = por %p38, %p39
      %p42 = scmp.ne.s32.totalorder %s27, %s41
      %p43 = scmp.eq.s32.totalorder %s22, 0
      %p44 = por %p42, %p43
      %s45 = ssub.s32 %s16, %s23
      %p46 = scmp.eq.s32.totalorder %s45, 0
      %s48 = sadd.s32 %s47, 1
      %s49 = scalar_select %p46, %s47, %s48
      %p52 = pneg %p46
      %p53 = scmp.eq.s32.totalorder %s16, 1
      %p54 = por %p52, %p53
      %p55 = scmp.ne.s32.totalorder %s47, %s50
      %p56 = scmp.eq.s32.totalorder %s16, 0
      %p57 = por %p55, %p56
      %p58 = scmp.ne.s32.totalorder %s47, %s50
      %p59 = scmp.eq.s32.totalorder %s21, 1
      %p60 = por %p58, %p59
      %p61 = scmp.ne.s32.totalorder %s50, %s51
      %p62 = scmp.eq.s32.totalorder %s21, 0
      %p63 = por %p61, %p62
      %p64 = scmp.ne.s32.totalorder %s50, %s51
      %p65 = scmp.eq.s32.totalorder %s22, 1
      %p66 = por %p64, %p65
      %p68 = scmp.ne.s32.totalorder %s51, %s67
      %p69 = scmp.eq.s32.totalorder %s22, 0
      %p70 = por %p68, %p69
      %s72 = sadd.s32 %s71, 1
      %p75 = scmp.eq.s32.totalorder %s16, 1
      %p76 = scmp.ne.s32.totalorder %s71, %s73
      %p77 = scmp.eq.s32.totalorder %s16, 0
      %p78 = por %p76, %p77
      %p79 = scmp.ne.s32.totalorder %s71, %s73
      %p80 = scmp.eq.s32.totalorder %s21, 1
      %p81 = por %p79, %p80
      %p82 = scmp.ne.s32.totalorder %s73, %s74
      %p83 = scmp.eq.s32.totalorder %s21, 0
      %p84 = por %p82, %p83
      %p85 = scmp.ne.s32.totalorder %s73, %s74
      %p86 = scmp.eq.s32.totalorder %s22, 1
      %p87 = por %p85, %p86
      %p89 = scmp.ne.s32.totalorder %s74, %s88
      %p90 = scmp.eq.s32.totalorder %s22, 0
      %p91 = por %p89, %p90
      %s92 = ssub.s32 %s16, %s23
      %p93 = scmp.eq.s32.totalorder %s92, 0
      %s95 = sadd.s32 %s94, 1
      %s96 = scalar_select %p93, %s94, %s95
      %p99 = pneg %p93
      %p100 = scmp.eq.s32.totalorder %s16, 1
      %p101 = por %p99, %p100
      %p102 = scmp.ne.s32.totalorder %s94, %s97
      %p103 = scmp.eq.s32.totalorder %s16, 0
      %p104 = por %p102, %p103
      %p105 = scmp.ne.s32.totalorder %s94, %s97
      %p106 = scmp.eq.s32.totalorder %s21, 1
      %p107 = por %p105, %p106
      %p108 = scmp.ne.s32.totalorder %s97, %s98
      %p109 = scmp.eq.s32.totalorder %s21, 0
      %p110 = por %p108, %p109
      %p111 = scmp.ne.s32.totalorder %s97, %s98
      %p112 = scmp.eq.s32.totalorder %s22, 1
      %p113 = por %p111, %p112
      %p115 = scmp.ne.s32.totalorder %s98, %s114
      %p116 = scmp.eq.s32.totalorder %s22, 0
      %p117 = por %p115, %p116
      %p118 = scmp.le.s32.totalorder 1, %s16
      %p119 = scmp.lt.s32.totalorder %s16, 3
      %p120 = pnand %p118, %p119
      %p121 = pneg %p120
      // Predicated region
      $region9: #{tpu_custom_call.1} parent=5 // pred_check
        _
      $region10: #{tpu_custom_call.1} parent=5 // pred_check_branch
        %123 = sbr.rel (%p120) target = $region12
      $region11: #{tpu_custom_call.1} parent=5 // pred_region
        %s124 = ssub.s32 %s16, 1
        // Predicated region
        $region13: #{tpu_custom_call.1} parent=11 // pred_check
          %p125 = pneg %p37
        $region14: #{tpu_custom_call.1} parent=11 // pred_check_branch
          %127 = sbr.rel (%p125) target = $region16
        $region15: #{tpu_custom_call.1} parent=11 // pred_region
          %s129 = ssub.s32 512, 512
          %130 = vsyncadd [#allocation3], %s129
          %s132 = sshll.u32 [#allocation2], 4
          %s133 = int_to_ptr.vmem [resolvable:$true] %s132
          %135 = dma.hbm_to_vmem [thread:$0]  %s0, 512, %s133, [#allocation3]
        $region16: #{tpu_custom_call.1} parent=11 // pred_fallthru
          _
        // Predicated region
        $region17: #{tpu_custom_call.1} parent=11 // pred_check
          %p136 = pneg %p84
        $region18: #{tpu_custom_call.1} parent=11 // pred_check_branch
          %138 = sbr.rel (%p136) target = $region20
        $region19: #{tpu_custom_call.1} parent=11 // pred_region
          %s140 = ssub.s32 256, 256
          %141 = vsyncadd [#allocation6], %s140
          %s143 = sshll.u32 [#allocation7], 4
          %s144 = int_to_ptr.vmem [resolvable:$true] %s143
          %146 = dma.hbm_to_vmem [thread:$0]  %s2, 256, %s144, [#allocation6]
        $region20: #{tpu_custom_call.1} parent=11 // pred_fallthru
          _
      $region12: #{tpu_custom_call.1} parent=5 // pred_fallthru
        _
      %p147 = scmp.lt.s32.totalorder %s16, 2
      // Predicated region
      $region21: #{tpu_custom_call.1} parent=5 // pred_check
        %p148 = pneg %p147
      $region22: #{tpu_custom_call.1} parent=5 // pred_check_branch
        %150 = sbr.rel (%p148) target = $region24
      $region23: #{tpu_custom_call.1} parent=5 // pred_region
        // Predicated region
        $region25: #{tpu_custom_call.1} parent=23 // pred_check
          %p151 = pneg %p57
        $region26: #{tpu_custom_call.1} parent=23 // pred_check_branch
          %153 = sbr.rel (%p151) target = $region28
        $region27: #{tpu_custom_call.1} parent=23 // pred_region
          %s154 = sand.u32 %s16, 1
          %s155 = scalar_lea.sflag [#allocation6], %s154
          %s156 = sand.u32 %s47, 1
          %s157 = smul.addr %s156, 2048
          %s158 = scalar_lea.vmem [#allocation5], %s157
          %s160 = ssub.s32 32768, 32768
          %161 = vsyncadd %s155, %s160
          %s162 = smul.addr %s16, 512
          %s163 = smul.addr %s162, 64
          %s164 = scalar_lea.hbm %s1, %s163
          %s165 = sshll.u32 %s158, 4
          %s166 = int_to_ptr.vmem [resolvable:$true] %s165
          %171 = dma.hbm_to_vmem [thread:$0]  %s164, 32768, %s166, %s155, 512, 512, 32
        $region28: #{tpu_custom_call.1} parent=23 // pred_fallthru
          _
      $region24: #{tpu_custom_call.1} parent=5 // pred_fallthru
        _
      %p172 = scmp.le.s32.totalorder 1, %s16
      %p173 = scmp.lt.s32.totalorder %s16, 3
      %p174 = pnand %p172, %p173
      %p175 = pneg %p174
      // Predicated region
      $region29: #{tpu_custom_call.1} parent=5 // pred_check
        _
      $region30: #{tpu_custom_call.1} parent=5 // pred_check_branch
        %177 = sbr.rel (%p174) target = $region32
      $region31: #{tpu_custom_call.1} parent=5 // pred_region
        %s178 = ssub.s32 %s16, 1
        // Predicated region
        $region33: #{tpu_custom_call.1} parent=31 // pred_check
          %p179 = pneg %p37
        $region34: #{tpu_custom_call.1} parent=31 // pred_check_branch
          %181 = sbr.rel (%p179) target = $region36
        $region35: #{tpu_custom_call.1} parent=31 // pred_region
          %182 = dma.done [#allocation3], 512
        $region36: #{tpu_custom_call.1} parent=31 // pred_fallthru
          _
        %s183 = sand.u32 %s21, 1
        %s184 = scalar_lea.sflag [#allocation6], %s183
        %s185 = sand.u32 %s50, 1
        %s186 = smul.addr %s185, 2048
        %s187 = scalar_lea.vmem [#allocation5], %s186
        // Predicated region
        $region37: #{tpu_custom_call.1} parent=31 // pred_check
          %p188 = pneg %p63
        $region38: #{tpu_custom_call.1} parent=31 // pred_check_branch
          %190 = sbr.rel (%p188) target = $region40
        $region39: #{tpu_custom_call.1} parent=31 // pred_region
          %191 = dma.done %s184, 32768
        $region40: #{tpu_custom_call.1} parent=31 // pred_fallthru
          _
        // Predicated region
        $region41: #{tpu_custom_call.1} parent=31 // pred_check
          %p192 = pneg %p84
        $region42: #{tpu_custom_call.1} parent=31 // pred_check_branch
          %194 = sbr.rel (%p192) target = $region44
        $region43: #{tpu_custom_call.1} parent=31 // pred_region
          %195 = dma.done [#allocation6], 256
        $region44: #{tpu_custom_call.1} parent=31 // pred_fallthru
          _
        %p196 = pneg %p37
        %p197 = pneg %p34
        %s198 = sand.u32 %s21, 1
        %s199 = scalar_lea.sflag [#allocation6], %s198
        %s200 = sand.u32 %s50, 1
        %s201 = smul.addr %s200, 2048
        %s202 = scalar_lea.vmem [#allocation5], %s201
        %p203 = pneg %p63
        %p204 = pneg %p60
        %p205 = pneg %p84
        %p206 = pneg %p81
        %p207 = pneg %p110
        %p208 = pneg %p107
        %s209 = sand.u32 %s97, 1
        %s210 = scalar_lea.sflag [#allocation4], %s209
        %s211 = sand.u32 %s97, 1
        %s212 = smul.addr %s211, 64
        %s213 = scalar_lea.vmem [#allocation8], %s212
        %s214 = smul.u32 8, %s21
        %v215 = vld [vmem:[#allocation2] sm:$0xff]
        %v216 = vld [vmem:[#allocation2 + $0x8] sm:$0xff]
        %v217 = vld [vmem:[#allocation2 + $0x10] sm:$0xff]
        %v218 = vld [vmem:[#allocation2 + $0x18] sm:$0xff]
        %v219 = vmax.f32 %v215, 0.0
        %v220 = vmax.f32 %v216, 0.0
        %v221 = vmax.f32 %v217, 0.0
        %v222 = vmax.f32 %v218, 0.0
        %v223 = vpack.c.bf16 %v219, %v219
        %v224 = vpack.c.bf16 %v220, %v220
        %v225 = vpack.c.bf16 %v221, %v221
        %v226 = vpack.c.bf16 %v222, %v222
        %v227 = vld [vmem:[%s187] sm:$0xff]
        %v228 = vld [vmem:[%s187 + $0x8] sm:$0xff]
        %v229 = vld [vmem:[%s187 + $0x10] sm:$0xff]
        %v230 = vld [vmem:[%s187 + $0x18] sm:$0xff]
        %v231 = vld [vmem:[%s187 + $0x20] sm:$0xff]
        %v232 = vld [vmem:[%s187 + $0x28] sm:$0xff]
        %v233 = vld [vmem:[%s187 + $0x30] sm:$0xff]
        %v234 = vld [vmem:[%s187 + $0x38] sm:$0xff]
        %v235 = vld [vmem:[%s187 + $0x40] sm:$0xff]
        %v236 = vld [vmem:[%s187 + $0x48] sm:$0xff]
        %v237 = vld [vmem:[%s187 + $0x50] sm:$0xff]
        %v238 = vld [vmem:[%s187 + $0x58] sm:$0xff]
        %v239 = vld [vmem:[%s187 + $0x60] sm:$0xff]
        %v240 = vld [vmem:[%s187 + $0x68] sm:$0xff]
        %v241 = vld [vmem:[%s187 + $0x70] sm:$0xff]
        %v242 = vld [vmem:[%s187 + $0x78] sm:$0xff]
        %v243 = vld [vmem:[%s187 + $0x80] sm:$0xff]
        %v244 = vld [vmem:[%s187 + $0x88] sm:$0xff]
        %v245 = vld [vmem:[%s187 + $0x90] sm:$0xff]
        %v246 = vld [vmem:[%s187 + $0x98] sm:$0xff]
        %v247 = vld [vmem:[%s187 + $0xa0] sm:$0xff]
        %v248 = vld [vmem:[%s187 + $0xa8] sm:$0xff]
        %v249 = vld [vmem:[%s187 + $0xb0] sm:$0xff]
        %v250 = vld [vmem:[%s187 + $0xb8] sm:$0xff]
        %v251 = vld [vmem:[%s187 + $0xc0] sm:$0xff]
        %v252 = vld [vmem:[%s187 + $0xc8] sm:$0xff]
        %v253 = vld [vmem:[%s187 + $0xd0] sm:$0xff]
        %v254 = vld [vmem:[%s187 + $0xd8] sm:$0xff]
        %v255 = vld [vmem:[%s187 + $0xe0] sm:$0xff]
        %v256 = vld [vmem:[%s187 + $0xe8] sm:$0xff]
        %v257 = vld [vmem:[%s187 + $0xf0] sm:$0xff]
        %v258 = vld [vmem:[%s187 + $0xf8] sm:$0xff]
        %v259 = vld [vmem:[%s187 + $0x100] sm:$0xff]
        %v260 = vld [vmem:[%s187 + $0x108] sm:$0xff]
        %v261 = vld [vmem:[%s187 + $0x110] sm:$0xff]
        %v262 = vld [vmem:[%s187 + $0x118] sm:$0xff]
        %v263 = vld [vmem:[%s187 + $0x120] sm:$0xff]
        %v264 = vld [vmem:[%s187 + $0x128] sm:$0xff]
        %v265 = vld [vmem:[%s187 + $0x130] sm:$0xff]
        %v266 = vld [vmem:[%s187 + $0x138] sm:$0xff]
        %v267 = vld [vmem:[%s187 + $0x140] sm:$0xff]
        %v268 = vld [vmem:[%s187 + $0x148] sm:$0xff]
        %v269 = vld [vmem:[%s187 + $0x150] sm:$0xff]
        %v270 = vld [vmem:[%s187 + $0x158] sm:$0xff]
        %v271 = vld [vmem:[%s187 + $0x160] sm:$0xff]
        %v272 = vld [vmem:[%s187 + $0x168] sm:$0xff]
        %v273 = vld [vmem:[%s187 + $0x170] sm:$0xff]
        %v274 = vld [vmem:[%s187 + $0x178] sm:$0xff]
        %v275 = vld [vmem:[%s187 + $0x180] sm:$0xff]
        %v276 = vld [vmem:[%s187 + $0x188] sm:$0xff]
        %v277 = vld [vmem:[%s187 + $0x190] sm:$0xff]
        %v278 = vld [vmem:[%s187 + $0x198] sm:$0xff]
        %v279 = vld [vmem:[%s187 + $0x1a0] sm:$0xff]
        %v280 = vld [vmem:[%s187 + $0x1a8] sm:$0xff]
        %v281 = vld [vmem:[%s187 + $0x1b0] sm:$0xff]
        %v282 = vld [vmem:[%s187 + $0x1b8] sm:$0xff]
        %v283 = vld [vmem:[%s187 + $0x1c0] sm:$0xff]
        %v284 = vld [vmem:[%s187 + $0x1c8] sm:$0xff]
        %v285 = vld [vmem:[%s187 + $0x1d0] sm:$0xff]
        %v286 = vld [vmem:[%s187 + $0x1d8] sm:$0xff]
        %v287 = vld [vmem:[%s187 + $0x1e0] sm:$0xff]
        %v288 = vld [vmem:[%s187 + $0x1e8] sm:$0xff]
        %v289 = vld [vmem:[%s187 + $0x1f0] sm:$0xff]
        %v290 = vld [vmem:[%s187 + $0x1f8] sm:$0xff]
        %v291 = vld [vmem:[%s187 + $0x200] sm:$0xff]
        %v292 = vld [vmem:[%s187 + $0x208] sm:$0xff]
        %v293 = vld [vmem:[%s187 + $0x210] sm:$0xff]
        %v294 = vld [vmem:[%s187 + $0x218] sm:$0xff]
        %v295 = vld [vmem:[%s187 + $0x220] sm:$0xff]
        %v296 = vld [vmem:[%s187 + $0x228] sm:$0xff]
        %v297 = vld [vmem:[%s187 + $0x230] sm:$0xff]
        %v298 = vld [vmem:[%s187 + $0x238] sm:$0xff]
        %v299 = vld [vmem:[%s187 + $0x240] sm:$0xff]
        %v300 = vld [vmem:[%s187 + $0x248] sm:$0xff]
        %v301 = vld [vmem:[%s187 + $0x250] sm:$0xff]
        %v302 = vld [vmem:[%s187 + $0x258] sm:$0xff]
        %v303 = vld [vmem:[%s187 + $0x260] sm:$0xff]
        %v304 = vld [vmem:[%s187 + $0x268] sm:$0xff]
        %v305 = vld [vmem:[%s187 + $0x270] sm:$0xff]
        %v306 = vld [vmem:[%s187 + $0x278] sm:$0xff]
        %v307 = vld [vmem:[%s187 + $0x280] sm:$0xff]
        %v308 = vld [vmem:[%s187 + $0x288] sm:$0xff]
        %v309 = vld [vmem:[%s187 + $0x290] sm:$0xff]
        %v310 = vld [vmem:[%s187 + $0x298] sm:$0xff]
        %v311 = vld [vmem:[%s187 + $0x2a0] sm:$0xff]
        %v312 = vld [vmem:[%s187 + $0x2a8] sm:$0xff]
        %v313 = vld [vmem:[%s187 + $0x2b0] sm:$0xff]
        %v314 = vld [vmem:[%s187 + $0x2b8] sm:$0xff]
        %v315 = vld [vmem:[%s187 + $0x2c0] sm:$0xff]
        %v316 = vld [vmem:[%s187 + $0x2c8] sm:$0xff]
        %v317 = vld [vmem:[%s187 + $0x2d0] sm:$0xff]
        %v318 = vld [vmem:[%s187 + $0x2d8] sm:$0xff]
        %v319 = vld [vmem:[%s187 + $0x2e0] sm:$0xff]
        %v320 = vld [vmem:[%s187 + $0x2e8] sm:$0xff]
        %v321 = vld [vmem:[%s187 + $0x2f0] sm:$0xff]
        %v322 = vld [vmem:[%s187 + $0x2f8] sm:$0xff]
        %v323 = vld [vmem:[%s187 + $0x300] sm:$0xff]
        %v324 = vld [vmem:[%s187 + $0x308] sm:$0xff]
        %v325 = vld [vmem:[%s187 + $0x310] sm:$0xff]
        %v326 = vld [vmem:[%s187 + $0x318] sm:$0xff]
        %v327 = vld [vmem:[%s187 + $0x320] sm:$0xff]
        %v328 = vld [vmem:[%s187 + $0x328] sm:$0xff]
        %v329 = vld [vmem:[%s187 + $0x330] sm:$0xff]
        %v330 = vld [vmem:[%s187 + $0x338] sm:$0xff]
        %v331 = vld [vmem:[%s187 + $0x340] sm:$0xff]
        %v332 = vld [vmem:[%s187 + $0x348] sm:$0xff]
        %v333 = vld [vmem:[%s187 + $0x350] sm:$0xff]
        %v334 = vld [vmem:[%s187 + $0x358] sm:$0xff]
        %v335 = vld [vmem:[%s187 + $0x360] sm:$0xff]
        %v336 = vld [vmem:[%s187 + $0x368] sm:$0xff]
        %v337 = vld [vmem:[%s187 + $0x370] sm:$0xff]
        %v338 = vld [vmem:[%s187 + $0x378] sm:$0xff]
        %v339 = vld [vmem:[%s187 + $0x380] sm:$0xff]
        %v340 = vld [vmem:[%s187 + $0x388] sm:$0xff]
        %v341 = vld [vmem:[%s187 + $0x390] sm:$0xff]
        %v342 = vld [vmem:[%s187 + $0x398] sm:$0xff]
        %v343 = vld [vmem:[%s187 + $0x3a0] sm:$0xff]
        %v344 = vld [vmem:[%s187 + $0x3a8] sm:$0xff]
        %v345 = vld [vmem:[%s187 + $0x3b0] sm:$0xff]
        %v346 = vld [vmem:[%s187 + $0x3b8] sm:$0xff]
        %v347 = vld [vmem:[%s187 + $0x3c0] sm:$0xff]
        %v348 = vld [vmem:[%s187 + $0x3c8] sm:$0xff]
        %v349 = vld [vmem:[%s187 + $0x3d0] sm:$0xff]
        %v350 = vld [vmem:[%s187 + $0x3d8] sm:$0xff]
        %v351 = vld [vmem:[%s187 + $0x3e0] sm:$0xff]
        %v352 = vld [vmem:[%s187 + $0x3e8] sm:$0xff]
        %v353 = vld [vmem:[%s187 + $0x3f0] sm:$0xff]
        %v354 = vld [vmem:[%s187 + $0x3f8] sm:$0xff]
        %v355 = vld [vmem:[%s187 + $0x400] sm:$0xff]
        %v356 = vld [vmem:[%s187 + $0x408] sm:$0xff]
        %v357 = vld [vmem:[%s187 + $0x410] sm:$0xff]
        %v358 = vld [vmem:[%s187 + $0x418] sm:$0xff]
        %v359 = vld [vmem:[%s187 + $0x420] sm:$0xff]
        %v360 = vld [vmem:[%s187 + $0x428] sm:$0xff]
        %v361 = vld [vmem:[%s187 + $0x430] sm:$0xff]
        %v362 = vld [vmem:[%s187 + $0x438] sm:$0xff]
        %v363 = vld [vmem:[%s187 + $0x440] sm:$0xff]
        %v364 = vld [vmem:[%s187 + $0x448] sm:$0xff]
        %v365 = vld [vmem:[%s187 + $0x450] sm:$0xff]
        %v366 = vld [vmem:[%s187 + $0x458] sm:$0xff]
        %v367 = vld [vmem:[%s187 + $0x460] sm:$0xff]
        %v368 = vld [vmem:[%s187 + $0x468] sm:$0xff]
        %v369 = vld [vmem:[%s187 + $0x470] sm:$0xff]
        %v370 = vld [vmem:[%s187 + $0x478] sm:$0xff]
        %v371 = vld [vmem:[%s187 + $0x480] sm:$0xff]
        %v372 = vld [vmem:[%s187 + $0x488] sm:$0xff]
        %v373 = vld [vmem:[%s187 + $0x490] sm:$0xff]
        %v374 = vld [vmem:[%s187 + $0x498] sm:$0xff]
        %v375 = vld [vmem:[%s187 + $0x4a0] sm:$0xff]
        %v376 = vld [vmem:[%s187 + $0x4a8] sm:$0xff]
        %v377 = vld [vmem:[%s187 + $0x4b0] sm:$0xff]
        %v378 = vld [vmem:[%s187 + $0x4b8] sm:$0xff]
        %v379 = vld [vmem:[%s187 + $0x4c0] sm:$0xff]
        %v380 = vld [vmem:[%s187 + $0x4c8] sm:$0xff]
        %v381 = vld [vmem:[%s187 + $0x4d0] sm:$0xff]
        %v382 = vld [vmem:[%s187 + $0x4d8] sm:$0xff]
        %v383 = vld [vmem:[%s187 + $0x4e0] sm:$0xff]
        %v384 = vld [vmem:[%s187 + $0x4e8] sm:$0xff]
        %v385 = vld [vmem:[%s187 + $0x4f0] sm:$0xff]
        %v386 = vld [vmem:[%s187 + $0x4f8] sm:$0xff]
        %v387 = vld [vmem:[%s187 + $0x500] sm:$0xff]
        %v388 = vld [vmem:[%s187 + $0x508] sm:$0xff]
        %v389 = vld [vmem:[%s187 + $0x510] sm:$0xff]
        %v390 = vld [vmem:[%s187 + $0x518] sm:$0xff]
        %v391 = vld [vmem:[%s187 + $0x520] sm:$0xff]
        %v392 = vld [vmem:[%s187 + $0x528] sm:$0xff]
        %v393 = vld [vmem:[%s187 + $0x530] sm:$0xff]
        %v394 = vld [vmem:[%s187 + $0x538] sm:$0xff]
        %v395 = vld [vmem:[%s187 + $0x540] sm:$0xff]
        %v396 = vld [vmem:[%s187 + $0x548] sm:$0xff]
        %v397 = vld [vmem:[%s187 + $0x550] sm:$0xff]
        %v398 = vld [vmem:[%s187 + $0x558] sm:$0xff]
        %v399 = vld [vmem:[%s187 + $0x560] sm:$0xff]
        %v400 = vld [vmem:[%s187 + $0x568] sm:$0xff]
        %v401 = vld [vmem:[%s187 + $0x570] sm:$0xff]
        %v402 = vld [vmem:[%s187 + $0x578] sm:$0xff]
        %v403 = vld [vmem:[%s187 + $0x580] sm:$0xff]
        %v404 = vld [vmem:[%s187 + $0x588] sm:$0xff]
        %v405 = vld [vmem:[%s187 + $0x590] sm:$0xff]
        %v406 = vld [vmem:[%s187 + $0x598] sm:$0xff]
        %v407 = vld [vmem:[%s187 + $0x5a0] sm:$0xff]
        %v408 = vld [vmem:[%s187 + $0x5a8] sm:$0xff]
        %v409 = vld [vmem:[%s187 + $0x5b0] sm:$0xff]
        %v410 = vld [vmem:[%s187 + $0x5b8] sm:$0xff]
        %v411 = vld [vmem:[%s187 + $0x5c0] sm:$0xff]
        %v412 = vld [vmem:[%s187 + $0x5c8] sm:$0xff]
        %v413 = vld [vmem:[%s187 + $0x5d0] sm:$0xff]
        %v414 = vld [vmem:[%s187 + $0x5d8] sm:$0xff]
        %v415 = vld [vmem:[%s187 + $0x5e0] sm:$0xff]
        %v416 = vld [vmem:[%s187 + $0x5e8] sm:$0xff]
        %v417 = vld [vmem:[%s187 + $0x5f0] sm:$0xff]
        %v418 = vld [vmem:[%s187 + $0x5f8] sm:$0xff]
        %v419 = vld [vmem:[%s187 + $0x600] sm:$0xff]
        %v420 = vld [vmem:[%s187 + $0x608] sm:$0xff]
        %v421 = vld [vmem:[%s187 + $0x610] sm:$0xff]
        %v422 = vld [vmem:[%s187 + $0x618] sm:$0xff]
        %v423 = vld [vmem:[%s187 + $0x620] sm:$0xff]
        %v424 = vld [vmem:[%s187 + $0x628] sm:$0xff]
        %v425 = vld [vmem:[%s187 + $0x630] sm:$0xff]
        %v426 = vld [vmem:[%s187 + $0x638] sm:$0xff]
        %v427 = vld [vmem:[%s187 + $0x640] sm:$0xff]
        %v428 = vld [vmem:[%s187 + $0x648] sm:$0xff]
        %v429 = vld [vmem:[%s187 + $0x650] sm:$0xff]
        %v430 = vld [vmem:[%s187 + $0x658] sm:$0xff]
        %v431 = vld [vmem:[%s187 + $0x660] sm:$0xff]
        %v432 = vld [vmem:[%s187 + $0x668] sm:$0xff]
        %v433 = vld [vmem:[%s187 + $0x670] sm:$0xff]
        %v434 = vld [vmem:[%s187 + $0x678] sm:$0xff]
        %v435 = vld [vmem:[%s187 + $0x680] sm:$0xff]
        %v436 = vld [vmem:[%s187 + $0x688] sm:$0xff]
        %v437 = vld [vmem:[%s187 + $0x690] sm:$0xff]
        %v438 = vld [vmem:[%s187 + $0x698] sm:$0xff]
        %v439 = vld [vmem:[%s187 + $0x6a0] sm:$0xff]
        %v440 = vld [vmem:[%s187 + $0x6a8] sm:$0xff]
        %v441 = vld [vmem:[%s187 + $0x6b0] sm:$0xff]
        %v442 = vld [vmem:[%s187 + $0x6b8] sm:$0xff]
        %v443 = vld [vmem:[%s187 + $0x6c0] sm:$0xff]
        %v444 = vld [vmem:[%s187 + $0x6c8] sm:$0xff]
        %v445 = vld [vmem:[%s187 + $0x6d0] sm:$0xff]
        %v446 = vld [vmem:[%s187 + $0x6d8] sm:$0xff]
        %v447 = vld [vmem:[%s187 + $0x6e0] sm:$0xff]
        %v448 = vld [vmem:[%s187 + $0x6e8] sm:$0xff]
        %v449 = vld [vmem:[%s187 + $0x6f0] sm:$0xff]
        %v450 = vld [vmem:[%s187 + $0x6f8] sm:$0xff]
        %v451 = vld [vmem:[%s187 + $0x700] sm:$0xff]
        %v452 = vld [vmem:[%s187 + $0x708] sm:$0xff]
        %v453 = vld [vmem:[%s187 + $0x710] sm:$0xff]
        %v454 = vld [vmem:[%s187 + $0x718] sm:$0xff]
        %v455 = vld [vmem:[%s187 + $0x720] sm:$0xff]
        %v456 = vld [vmem:[%s187 + $0x728] sm:$0xff]
        %v457 = vld [vmem:[%s187 + $0x730] sm:$0xff]
        %v458 = vld [vmem:[%s187 + $0x738] sm:$0xff]
        %v459 = vld [vmem:[%s187 + $0x740] sm:$0xff]
        %v460 = vld [vmem:[%s187 + $0x748] sm:$0xff]
        %v461 = vld [vmem:[%s187 + $0x750] sm:$0xff]
        %v462 = vld [vmem:[%s187 + $0x758] sm:$0xff]
        %v463 = vld [vmem:[%s187 + $0x760] sm:$0xff]
        %v464 = vld [vmem:[%s187 + $0x768] sm:$0xff]
        %v465 = vld [vmem:[%s187 + $0x770] sm:$0xff]
        %v466 = vld [vmem:[%s187 + $0x778] sm:$0xff]
        %v467 = vld [vmem:[%s187 + $0x780] sm:$0xff]
        %v468 = vld [vmem:[%s187 + $0x788] sm:$0xff]
        %v469 = vld [vmem:[%s187 + $0x790] sm:$0xff]
        %v470 = vld [vmem:[%s187 + $0x798] sm:$0xff]
        %v471 = vld [vmem:[%s187 + $0x7a0] sm:$0xff]
        %v472 = vld [vmem:[%s187 + $0x7a8] sm:$0xff]
        %v473 = vld [vmem:[%s187 + $0x7b0] sm:$0xff]
        %v474 = vld [vmem:[%s187 + $0x7b8] sm:$0xff]
        %v475 = vld [vmem:[%s187 + $0x7c0] sm:$0xff]
        %v476 = vld [vmem:[%s187 + $0x7c8] sm:$0xff]
        %v477 = vld [vmem:[%s187 + $0x7d0] sm:$0xff]
        %v478 = vld [vmem:[%s187 + $0x7d8] sm:$0xff]
        %v479 = vld [vmem:[%s187 + $0x7e0] sm:$0xff]
        %v480 = vld [vmem:[%s187 + $0x7e8] sm:$0xff]
        %v481 = vld [vmem:[%s187 + $0x7f0] sm:$0xff]
        %v482 = vld [vmem:[%s187 + $0x7f8] sm:$0xff]
        %s483 = smul.u32 %s21, 1024
        %s484 = sshra.s32 %s483, 7
        %s485 = sand.u32 %s483, 127
        %s486 = scalar_lea.vmem [#allocation7], %s484
        %v487 = vld [vmem:[%s486] sm:$0xff]
        %v489 = vlaneseq
        %v490 = vshrl.u32 %v489, 7
        %v491 = vsub.s32 0, %v490
        %v492 = vrot.slane %v487, %v491
        %v493 = vlaneseq
        %v494 = vshrl.u32 %v493, 7
        %v495 = vsub.s32 1, %v494
        %v496 = vrot.slane %v487, %v495
        %v497 = vlaneseq
        %v498 = vshrl.u32 %v497, 7
        %v499 = vsub.s32 2, %v498
        %v500 = vrot.slane %v487, %v499
        %v501 = vlaneseq
        %v502 = vshrl.u32 %v501, 7
        %v503 = vsub.s32 3, %v502
        %v504 = vrot.slane %v487, %v503
        %v505 = vlaneseq
        %v506 = vshrl.u32 %v505, 7
        %v507 = vsub.s32 4, %v506
        %v508 = vrot.slane %v487, %v507
        %v509 = vlaneseq
        %v510 = vshrl.u32 %v509, 7
        %v511 = vsub.s32 5, %v510
        %v512 = vrot.slane %v487, %v511
        %v513 = vlaneseq
        %v514 = vshrl.u32 %v513, 7
        %v515 = vsub.s32 6, %v514
        %v516 = vrot.slane %v487, %v515
        %v517 = vlaneseq
        %v518 = vshrl.u32 %v517, 7
        %v519 = vsub.s32 7, %v518
        %v520 = vrot.slane %v487, %v519
        %v785 = vunpack.c.l.b16 %v227
        %v786 = vunpack.c.h.b16 %v227
        %v787 = vunpack.c.l.b16 %v228
        %v788 = vunpack.c.h.b16 %v228
        %v789 = vunpack.c.l.b16 %v229
        %v790 = vunpack.c.h.b16 %v229
        %v791 = vunpack.c.l.b16 %v230
        %v792 = vunpack.c.h.b16 %v230
        %v793 = vunpack.c.l.b16 %v231
        %v794 = vunpack.c.h.b16 %v231
        %v795 = vunpack.c.l.b16 %v232
        %v796 = vunpack.c.h.b16 %v232
        %v797 = vunpack.c.l.b16 %v233
        %v798 = vunpack.c.h.b16 %v233
        %v799 = vunpack.c.l.b16 %v234
        %v800 = vunpack.c.h.b16 %v234
        %v801 = vunpack.c.l.b16 %v235
        %v802 = vunpack.c.h.b16 %v235
        %v803 = vunpack.c.l.b16 %v236
        %v804 = vunpack.c.h.b16 %v236
        %v805 = vunpack.c.l.b16 %v237
        %v806 = vunpack.c.h.b16 %v237
        %v807 = vunpack.c.l.b16 %v238
        %v808 = vunpack.c.h.b16 %v238
        %v809 = vunpack.c.l.b16 %v239
        %v810 = vunpack.c.h.b16 %v239
        %v811 = vunpack.c.l.b16 %v240
        %v812 = vunpack.c.h.b16 %v240
        %v813 = vunpack.c.l.b16 %v241
        %v814 = vunpack.c.h.b16 %v241
        %v815 = vunpack.c.l.b16 %v242
        %v816 = vunpack.c.h.b16 %v242
        %v817 = vunpack.c.l.b16 %v243
        %v818 = vunpack.c.h.b16 %v243
        %v819 = vunpack.c.l.b16 %v244
        %v820 = vunpack.c.h.b16 %v244
        %v821 = vunpack.c.l.b16 %v245
        %v822 = vunpack.c.h.b16 %v245
        %v823 = vunpack.c.l.b16 %v246
        %v824 = vunpack.c.h.b16 %v246
        %v825 = vunpack.c.l.b16 %v247
        %v826 = vunpack.c.h.b16 %v247
        %v827 = vunpack.c.l.b16 %v248
        %v828 = vunpack.c.h.b16 %v248
        %v829 = vunpack.c.l.b16 %v249
        %v830 = vunpack.c.h.b16 %v249
        %v831 = vunpack.c.l.b16 %v250
        %v832 = vunpack.c.h.b16 %v250
        %v833 = vunpack.c.l.b16 %v251
        %v834 = vunpack.c.h.b16 %v251
        %v835 = vunpack.c.l.b16 %v252
        %v836 = vunpack.c.h.b16 %v252
        %v837 = vunpack.c.l.b16 %v253
        %v838 = vunpack.c.h.b16 %v253
        %v839 = vunpack.c.l.b16 %v254
        %v840 = vunpack.c.h.b16 %v254
        %v841 = vunpack.c.l.b16 %v255
        %v842 = vunpack.c.h.b16 %v255
        %v843 = vunpack.c.l.b16 %v256
        %v844 = vunpack.c.h.b16 %v256
        %v845 = vunpack.c.l.b16 %v257
        %v846 = vunpack.c.h.b16 %v257
        %v847 = vunpack.c.l.b16 %v258
        %v848 = vunpack.c.h.b16 %v258
        %v849 = vunpack.c.l.b16 %v259
        %v850 = vunpack.c.h.b16 %v259
        %v851 = vunpack.c.l.b16 %v260
        %v852 = vunpack.c.h.b16 %v260
        %v853 = vunpack.c.l.b16 %v261
        %v854 = vunpack.c.h.b16 %v261
        %v855 = vunpack.c.l.b16 %v262
        %v856 = vunpack.c.h.b16 %v262
        %v857 = vunpack.c.l.b16 %v263
        %v858 = vunpack.c.h.b16 %v263
        %v859 = vunpack.c.l.b16 %v264
        %v860 = vunpack.c.h.b16 %v264
        %v861 = vunpack.c.l.b16 %v265
        %v862 = vunpack.c.h.b16 %v265
        %v863 = vunpack.c.l.b16 %v266
        %v864 = vunpack.c.h.b16 %v266
        %v865 = vunpack.c.l.b16 %v267
        %v866 = vunpack.c.h.b16 %v267
        %v867 = vunpack.c.l.b16 %v268
        %v868 = vunpack.c.h.b16 %v268
        %v869 = vunpack.c.l.b16 %v269
        %v870 = vunpack.c.h.b16 %v269
        %v871 = vunpack.c.l.b16 %v270
        %v872 = vunpack.c.h.b16 %v270
        %v873 = vunpack.c.l.b16 %v271
        %v874 = vunpack.c.h.b16 %v271
        %v875 = vunpack.c.l.b16 %v272
        %v876 = vunpack.c.h.b16 %v272
        %v877 = vunpack.c.l.b16 %v273
        %v878 = vunpack.c.h.b16 %v273
        %v879 = vunpack.c.l.b16 %v274
        %v880 = vunpack.c.h.b16 %v274
        %v881 = vunpack.c.l.b16 %v275
        %v882 = vunpack.c.h.b16 %v275
        %v883 = vunpack.c.l.b16 %v276
        %v884 = vunpack.c.h.b16 %v276
        %v885 = vunpack.c.l.b16 %v277
        %v886 = vunpack.c.h.b16 %v277
        %v887 = vunpack.c.l.b16 %v278
        %v888 = vunpack.c.h.b16 %v278
        %v889 = vunpack.c.l.b16 %v279
        %v890 = vunpack.c.h.b16 %v279
        %v891 = vunpack.c.l.b16 %v280
        %v892 = vunpack.c.h.b16 %v280
        %v893 = vunpack.c.l.b16 %v281
        %v894 = vunpack.c.h.b16 %v281
        %v895 = vunpack.c.l.b16 %v282
        %v896 = vunpack.c.h.b16 %v282
        %v897 = vunpack.c.l.b16 %v283
        %v898 = vunpack.c.h.b16 %v283
        %v899 = vunpack.c.l.b16 %v284
        %v900 = vunpack.c.h.b16 %v284
        %v901 = vunpack.c.l.b16 %v285
        %v902 = vunpack.c.h.b16 %v285
        %v903 = vunpack.c.l.b16 %v286
        %v904 = vunpack.c.h.b16 %v286
        %v905 = vunpack.c.l.b16 %v287
        %v906 = vunpack.c.h.b16 %v287
        %v907 = vunpack.c.l.b16 %v288
        %v908 = vunpack.c.h.b16 %v288
        %v909 = vunpack.c.l.b16 %v289
        %v910 = vunpack.c.h.b16 %v289
        %v911 = vunpack.c.l.b16 %v290
        %v912 = vunpack.c.h.b16 %v290
        %v913 = vunpack.c.l.b16 %v291
        %v914 = vunpack.c.h.b16 %v291
        %v915 = vunpack.c.l.b16 %v292
        %v916 = vunpack.c.h.b16 %v292
        %v917 = vunpack.c.l.b16 %v293
        %v918 = vunpack.c.h.b16 %v293
        %v919 = vunpack.c.l.b16 %v294
        %v920 = vunpack.c.h.b16 %v294
        %v921 = vunpack.c.l.b16 %v295
        %v922 = vunpack.c.h.b16 %v295
        %v923 = vunpack.c.l.b16 %v296
        %v924 = vunpack.c.h.b16 %v296
        %v925 = vunpack.c.l.b16 %v297
        %v926 = vunpack.c.h.b16 %v297
        %v927 = vunpack.c.l.b16 %v298
        %v928 = vunpack.c.h.b16 %v298
        %v929 = vunpack.c.l.b16 %v299
        %v930 = vunpack.c.h.b16 %v299
        %v931 = vunpack.c.l.b16 %v300
        %v932 = vunpack.c.h.b16 %v300
        %v933 = vunpack.c.l.b16 %v301
        %v934 = vunpack.c.h.b16 %v301
        %v935 = vunpack.c.l.b16 %v302
        %v936 = vunpack.c.h.b16 %v302
        %v937 = vunpack.c.l.b16 %v303
        %v938 = vunpack.c.h.b16 %v303
        %v939 = vunpack.c.l.b16 %v304
        %v940 = vunpack.c.h.b16 %v304
        %v941 = vunpack.c.l.b16 %v305
        %v942 = vunpack.c.h.b16 %v305
        %v943 = vunpack.c.l.b16 %v306
        %v944 = vunpack.c.h.b16 %v306
        %v945 = vunpack.c.l.b16 %v307
        %v946 = vunpack.c.h.b16 %v307
        %v947 = vunpack.c.l.b16 %v308
        %v948 = vunpack.c.h.b16 %v308
        %v949 = vunpack.c.l.b16 %v309
        %v950 = vunpack.c.h.b16 %v309
        %v951 = vunpack.c.l.b16 %v310
        %v952 = vunpack.c.h.b16 %v310
        %v953 = vunpack.c.l.b16 %v311
        %v954 = vunpack.c.h.b16 %v311
        %v955 = vunpack.c.l.b16 %v312
        %v956 = vunpack.c.h.b16 %v312
        %v957 = vunpack.c.l.b16 %v313
        %v958 = vunpack.c.h.b16 %v313
        %v959 = vunpack.c.l.b16 %v314
        %v960 = vunpack.c.h.b16 %v314
        %v961 = vunpack.c.l.b16 %v315
        %v962 = vunpack.c.h.b16 %v315
        %v963 = vunpack.c.l.b16 %v316
        %v964 = vunpack.c.h.b16 %v316
        %v965 = vunpack.c.l.b16 %v317
        %v966 = vunpack.c.h.b16 %v317
        %v967 = vunpack.c.l.b16 %v318
        %v968 = vunpack.c.h.b16 %v318
        %v969 = vunpack.c.l.b16 %v319
        %v970 = vunpack.c.h.b16 %v319
        %v971 = vunpack.c.l.b16 %v320
        %v972 = vunpack.c.h.b16 %v320
        %v973 = vunpack.c.l.b16 %v321
        %v974 = vunpack.c.h.b16 %v321
        %v975 = vunpack.c.l.b16 %v322
        %v976 = vunpack.c.h.b16 %v322
        %v977 = vunpack.c.l.b16 %v323
        %v978 = vunpack.c.h.b16 %v323
        %v979 = vunpack.c.l.b16 %v324
        %v980 = vunpack.c.h.b16 %v324
        %v981 = vunpack.c.l.b16 %v325
        %v982 = vunpack.c.h.b16 %v325
        %v983 = vunpack.c.l.b16 %v326
        %v984 = vunpack.c.h.b16 %v326
        %v985 = vunpack.c.l.b16 %v327
        %v986 = vunpack.c.h.b16 %v327
        %v987 = vunpack.c.l.b16 %v328
        %v988 = vunpack.c.h.b16 %v328
        %v989 = vunpack.c.l.b16 %v329
        %v990 = vunpack.c.h.b16 %v329
        %v991 = vunpack.c.l.b16 %v330
        %v992 = vunpack.c.h.b16 %v330
        %v993 = vunpack.c.l.b16 %v331
        %v994 = vunpack.c.h.b16 %v331
        %v995 = vunpack.c.l.b16 %v332
        %v996 = vunpack.c.h.b16 %v332
        %v997 = vunpack.c.l.b16 %v333
        %v998 = vunpack.c.h.b16 %v333
        %v999 = vunpack.c.l.b16 %v334
        %v1000 = vunpack.c.h.b16 %v334
        %v1001 = vunpack.c.l.b16 %v335
        %v1002 = vunpack.c.h.b16 %v335
        %v1003 = vunpack.c.l.b16 %v336
        %v1004 = vunpack.c.h.b16 %v336
        %v1005 = vunpack.c.l.b16 %v337
        %v1006 = vunpack.c.h.b16 %v337
        %v1007 = vunpack.c.l.b16 %v338
        %v1008 = vunpack.c.h.b16 %v338
        %v1009 = vunpack.c.l.b16 %v339
        %v1010 = vunpack.c.h.b16 %v339
        %v1011 = vunpack.c.l.b16 %v340
        %v1012 = vunpack.c.h.b16 %v340
        %v1013 = vunpack.c.l.b16 %v341
        %v1014 = vunpack.c.h.b16 %v341
        %v1015 = vunpack.c.l.b16 %v342
        %v1016 = vunpack.c.h.b16 %v342
        %v1017 = vunpack.c.l.b16 %v343
        %v1018 = vunpack.c.h.b16 %v343
        %v1019 = vunpack.c.l.b16 %v344
        %v1020 = vunpack.c.h.b16 %v344
        %v1021 = vunpack.c.l.b16 %v345
        %v1022 = vunpack.c.h.b16 %v345
        %v1023 = vunpack.c.l.b16 %v346
        %v1024 = vunpack.c.h.b16 %v346
        %v1025 = vunpack.c.l.b16 %v347
        %v1026 = vunpack.c.h.b16 %v347
        %v1027 = vunpack.c.l.b16 %v348
        %v1028 = vunpack.c.h.b16 %v348
        %v1029 = vunpack.c.l.b16 %v349
        %v1030 = vunpack.c.h.b16 %v349
        %v1031 = vunpack.c.l.b16 %v350
        %v1032 = vunpack.c.h.b16 %v350
        %v1033 = vunpack.c.l.b16 %v351
        %v1034 = vunpack.c.h.b16 %v351
        %v1035 = vunpack.c.l.b16 %v352
        %v1036 = vunpack.c.h.b16 %v352
        %v1037 = vunpack.c.l.b16 %v353
        %v1038 = vunpack.c.h.b16 %v353
        %v1039 = vunpack.c.l.b16 %v354
        %v1040 = vunpack.c.h.b16 %v354
        %v1041 = vunpack.c.l.b16 %v355
        %v1042 = vunpack.c.h.b16 %v355
        %v1043 = vunpack.c.l.b16 %v356
        %v1044 = vunpack.c.h.b16 %v356
        %v1045 = vunpack.c.l.b16 %v357
        %v1046 = vunpack.c.h.b16 %v357
        %v1047 = vunpack.c.l.b16 %v358
        %v1048 = vunpack.c.h.b16 %v358
        %v1049 = vunpack.c.l.b16 %v359
        %v1050 = vunpack.c.h.b16 %v359
        %v1051 = vunpack.c.l.b16 %v360
        %v1052 = vunpack.c.h.b16 %v360
        %v1053 = vunpack.c.l.b16 %v361
        %v1054 = vunpack.c.h.b16 %v361
        %v1055 = vunpack.c.l.b16 %v362
        %v1056 = vunpack.c.h.b16 %v362
        %v1057 = vunpack.c.l.b16 %v363
        %v1058 = vunpack.c.h.b16 %v363
        %v1059 = vunpack.c.l.b16 %v364
        %v1060 = vunpack.c.h.b16 %v364
        %v1061 = vunpack.c.l.b16 %v365
        %v1062 = vunpack.c.h.b16 %v365
        %v1063 = vunpack.c.l.b16 %v366
        %v1064 = vunpack.c.h.b16 %v366
        %v1065 = vunpack.c.l.b16 %v367
        %v1066 = vunpack.c.h.b16 %v367
        %v1067 = vunpack.c.l.b16 %v368
        %v1068 = vunpack.c.h.b16 %v368
        %v1069 = vunpack.c.l.b16 %v369
        %v1070 = vunpack.c.h.b16 %v369
        %v1071 = vunpack.c.l.b16 %v370
        %v1072 = vunpack.c.h.b16 %v370
        %v1073 = vunpack.c.l.b16 %v371
        %v1074 = vunpack.c.h.b16 %v371
        %v1075 = vunpack.c.l.b16 %v372
        %v1076 = vunpack.c.h.b16 %v372
        %v1077 = vunpack.c.l.b16 %v373
        %v1078 = vunpack.c.h.b16 %v373
        %v1079 = vunpack.c.l.b16 %v374
        %v1080 = vunpack.c.h.b16 %v374
        %v1081 = vunpack.c.l.b16 %v375
        %v1082 = vunpack.c.h.b16 %v375
        %v1083 = vunpack.c.l.b16 %v376
        %v1084 = vunpack.c.h.b16 %v376
        %v1085 = vunpack.c.l.b16 %v377
        %v1086 = vunpack.c.h.b16 %v377
        %v1087 = vunpack.c.l.b16 %v378
        %v1088 = vunpack.c.h.b16 %v378
        %v1089 = vunpack.c.l.b16 %v379
        %v1090 = vunpack.c.h.b16 %v379
        %v1091 = vunpack.c.l.b16 %v380
        %v1092 = vunpack.c.h.b16 %v380
        %v1093 = vunpack.c.l.b16 %v381
        %v1094 = vunpack.c.h.b16 %v381
        %v1095 = vunpack.c.l.b16 %v382
        %v1096 = vunpack.c.h.b16 %v382
        %v1097 = vunpack.c.l.b16 %v383
        %v1098 = vunpack.c.h.b16 %v383
        %v1099 = vunpack.c.l.b16 %v384
        %v1100 = vunpack.c.h.b16 %v384
        %v1101 = vunpack.c.l.b16 %v385
        %v1102 = vunpack.c.h.b16 %v385
        %v1103 = vunpack.c.l.b16 %v386
        %v1104 = vunpack.c.h.b16 %v386
        %v1105 = vunpack.c.l.b16 %v387
        %v1106 = vunpack.c.h.b16 %v387
        %v1107 = vunpack.c.l.b16 %v388
        %v1108 = vunpack.c.h.b16 %v388
        %v1109 = vunpack.c.l.b16 %v389
        %v1110 = vunpack.c.h.b16 %v389
        %v1111 = vunpack.c.l.b16 %v390
        %v1112 = vunpack.c.h.b16 %v390
        %v1113 = vunpack.c.l.b16 %v391
        %v1114 = vunpack.c.h.b16 %v391
        %v1115 = vunpack.c.l.b16 %v392
        %v1116 = vunpack.c.h.b16 %v392
        %v1117 = vunpack.c.l.b16 %v393
        %v1118 = vunpack.c.h.b16 %v393
        %v1119 = vunpack.c.l.b16 %v394
        %v1120 = vunpack.c.h.b16 %v394
        %v1121 = vunpack.c.l.b16 %v395
        %v1122 = vunpack.c.h.b16 %v395
        %v1123 = vunpack.c.l.b16 %v396
        %v1124 = vunpack.c.h.b16 %v396
        %v1125 = vunpack.c.l.b16 %v397
        %v1126 = vunpack.c.h.b16 %v397
        %v1127 = vunpack.c.l.b16 %v398
        %v1128 = vunpack.c.h.b16 %v398
        %v1129 = vunpack.c.l.b16 %v399
        %v1130 = vunpack.c.h.b16 %v399
        %v1131 = vunpack.c.l.b16 %v400
        %v1132 = vunpack.c.h.b16 %v400
        %v1133 = vunpack.c.l.b16 %v401
        %v1134 = vunpack.c.h.b16 %v401
        %v1135 = vunpack.c.l.b16 %v402
        %v1136 = vunpack.c.h.b16 %v402
        %v1137 = vunpack.c.l.b16 %v403
        %v1138 = vunpack.c.h.b16 %v403
        %v1139 = vunpack.c.l.b16 %v404
        %v1140 = vunpack.c.h.b16 %v404
        %v1141 = vunpack.c.l.b16 %v405
        %v1142 = vunpack.c.h.b16 %v405
        %v1143 = vunpack.c.l.b16 %v406
        %v1144 = vunpack.c.h.b16 %v406
        %v1145 = vunpack.c.l.b16 %v407
        %v1146 = vunpack.c.h.b16 %v407
        %v1147 = vunpack.c.l.b16 %v408
        %v1148 = vunpack.c.h.b16 %v408
        %v1149 = vunpack.c.l.b16 %v409
        %v1150 = vunpack.c.h.b16 %v409
        %v1151 = vunpack.c.l.b16 %v410
        %v1152 = vunpack.c.h.b16 %v410
        %v1153 = vunpack.c.l.b16 %v411
        %v1154 = vunpack.c.h.b16 %v411
        %v1155 = vunpack.c.l.b16 %v412
        %v1156 = vunpack.c.h.b16 %v412
        %v1157 = vunpack.c.l.b16 %v413
        %v1158 = vunpack.c.h.b16 %v413
        %v1159 = vunpack.c.l.b16 %v414
        %v1160 = vunpack.c.h.b16 %v414
        %v1161 = vunpack.c.l.b16 %v415
        %v1162 = vunpack.c.h.b16 %v415
        %v1163 = vunpack.c.l.b16 %v416
        %v1164 = vunpack.c.h.b16 %v416
        %v1165 = vunpack.c.l.b16 %v417
        %v1166 = vunpack.c.h.b16 %v417
        %v1167 = vunpack.c.l.b16 %v418
        %v1168 = vunpack.c.h.b16 %v418
        %v1169 = vunpack.c.l.b16 %v419
        %v1170 = vunpack.c.h.b16 %v419
        %v1171 = vunpack.c.l.b16 %v420
        %v1172 = vunpack.c.h.b16 %v420
        %v1173 = vunpack.c.l.b16 %v421
        %v1174 = vunpack.c.h.b16 %v421
        %v1175 = vunpack.c.l.b16 %v422
        %v1176 = vunpack.c.h.b16 %v422
        %v1177 = vunpack.c.l.b16 %v423
        %v1178 = vunpack.c.h.b16 %v423
        %v1179 = vunpack.c.l.b16 %v424
        %v1180 = vunpack.c.h.b16 %v424
        %v1181 = vunpack.c.l.b16 %v425
        %v1182 = vunpack.c.h.b16 %v425
        %v1183 = vunpack.c.l.b16 %v426
        %v1184 = vunpack.c.h.b16 %v426
        %v1185 = vunpack.c.l.b16 %v427
        %v1186 = vunpack.c.h.b16 %v427
        %v1187 = vunpack.c.l.b16 %v428
        %v1188 = vunpack.c.h.b16 %v428
        %v1189 = vunpack.c.l.b16 %v429
        %v1190 = vunpack.c.h.b16 %v429
        %v1191 = vunpack.c.l.b16 %v430
        %v1192 = vunpack.c.h.b16 %v430
        %v1193 = vunpack.c.l.b16 %v431
        %v1194 = vunpack.c.h.b16 %v431
        %v1195 = vunpack.c.l.b16 %v432
        %v1196 = vunpack.c.h.b16 %v432
        %v1197 = vunpack.c.l.b16 %v433
        %v1198 = vunpack.c.h.b16 %v433
        %v1199 = vunpack.c.l.b16 %v434
        %v1200 = vunpack.c.h.b16 %v434
        %v1201 = vunpack.c.l.b16 %v435
        %v1202 = vunpack.c.h.b16 %v435
        %v1203 = vunpack.c.l.b16 %v436
        %v1204 = vunpack.c.h.b16 %v436
        %v1205 = vunpack.c.l.b16 %v437
        %v1206 = vunpack.c.h.b16 %v437
        %v1207 = vunpack.c.l.b16 %v438
        %v1208 = vunpack.c.h.b16 %v438
        %v1209 = vunpack.c.l.b16 %v439
        %v1210 = vunpack.c.h.b16 %v439
        %v1211 = vunpack.c.l.b16 %v440
        %v1212 = vunpack.c.h.b16 %v440
        %v1213 = vunpack.c.l.b16 %v441
        %v1214 = vunpack.c.h.b16 %v441
        %v1215 = vunpack.c.l.b16 %v442
        %v1216 = vunpack.c.h.b16 %v442
        %v1217 = vunpack.c.l.b16 %v443
        %v1218 = vunpack.c.h.b16 %v443
        %v1219 = vunpack.c.l.b16 %v444
        %v1220 = vunpack.c.h.b16 %v444
        %v1221 = vunpack.c.l.b16 %v445
        %v1222 = vunpack.c.h.b16 %v445
        %v1223 = vunpack.c.l.b16 %v446
        %v1224 = vunpack.c.h.b16 %v446
        %v1225 = vunpack.c.l.b16 %v447
        %v1226 = vunpack.c.h.b16 %v447
        %v1227 = vunpack.c.l.b16 %v448
        %v1228 = vunpack.c.h.b16 %v448
        %v1229 = vunpack.c.l.b16 %v449
        %v1230 = vunpack.c.h.b16 %v449
        %v1231 = vunpack.c.l.b16 %v450
        %v1232 = vunpack.c.h.b16 %v450
        %v1233 = vunpack.c.l.b16 %v451
        %v1234 = vunpack.c.h.b16 %v451
        %v1235 = vunpack.c.l.b16 %v452
        %v1236 = vunpack.c.h.b16 %v452
        %v1237 = vunpack.c.l.b16 %v453
        %v1238 = vunpack.c.h.b16 %v453
        %v1239 = vunpack.c.l.b16 %v454
        %v1240 = vunpack.c.h.b16 %v454
        %v1241 = vunpack.c.l.b16 %v455
        %v1242 = vunpack.c.h.b16 %v455
        %v1243 = vunpack.c.l.b16 %v456
        %v1244 = vunpack.c.h.b16 %v456
        %v1245 = vunpack.c.l.b16 %v457
        %v1246 = vunpack.c.h.b16 %v457
        %v1247 = vunpack.c.l.b16 %v458
        %v1248 = vunpack.c.h.b16 %v458
        %v1249 = vunpack.c.l.b16 %v459
        %v1250 = vunpack.c.h.b16 %v459
        %v1251 = vunpack.c.l.b16 %v460
        %v1252 = vunpack.c.h.b16 %v460
        %v1253 = vunpack.c.l.b16 %v461
        %v1254 = vunpack.c.h.b16 %v461
        %v1255 = vunpack.c.l.b16 %v462
        %v1256 = vunpack.c.h.b16 %v462
        %v1257 = vunpack.c.l.b16 %v463
        %v1258 = vunpack.c.h.b16 %v463
        %v1259 = vunpack.c.l.b16 %v464
        %v1260 = vunpack.c.h.b16 %v464
        %v1261 = vunpack.c.l.b16 %v465
        %v1262 = vunpack.c.h.b16 %v465
        %v1263 = vunpack.c.l.b16 %v466
        %v1264 = vunpack.c.h.b16 %v466
        %v1265 = vunpack.c.l.b16 %v467
        %v1266 = vunpack.c.h.b16 %v467
        %v1267 = vunpack.c.l.b16 %v468
        %v1268 = vunpack.c.h.b16 %v468
        %v1269 = vunpack.c.l.b16 %v469
        %v1270 = vunpack.c.h.b16 %v469
        %v1271 = vunpack.c.l.b16 %v470
        %v1272 = vunpack.c.h.b16 %v470
        %v1273 = vunpack.c.l.b16 %v471
        %v1274 = vunpack.c.h.b16 %v471
        %v1275 = vunpack.c.l.b16 %v472
        %v1276 = vunpack.c.h.b16 %v472
        %v1277 = vunpack.c.l.b16 %v473
        %v1278 = vunpack.c.h.b16 %v473
        %v1279 = vunpack.c.l.b16 %v474
        %v1280 = vunpack.c.h.b16 %v474
        %v1281 = vunpack.c.l.b16 %v475
        %v1282 = vunpack.c.h.b16 %v475
        %v1283 = vunpack.c.l.b16 %v476
        %v1284 = vunpack.c.h.b16 %v476
        %v1285 = vunpack.c.l.b16 %v477
        %v1286 = vunpack.c.h.b16 %v477
        %v1287 = vunpack.c.l.b16 %v478
        %v1288 = vunpack.c.h.b16 %v478
        %v1289 = vunpack.c.l.b16 %v479
        %v1290 = vunpack.c.h.b16 %v479
        %v1291 = vunpack.c.l.b16 %v480
        %v1292 = vunpack.c.h.b16 %v480
        %v1293 = vunpack.c.l.b16 %v481
        %v1294 = vunpack.c.h.b16 %v481
        %v1295 = vunpack.c.l.b16 %v482
        %v1296 = vunpack.c.h.b16 %v482
        %v1297 = vpack.c.b16 %v793, %v785
        %v1298 = vpack.c.b16 %v794, %v786
        %v1299 = vpack.c.b16 %v795, %v787
        %v1300 = vpack.c.b16 %v796, %v788
        %v1301 = vpack.c.b16 %v797, %v789
        %v1302 = vpack.c.b16 %v798, %v790
        %v1303 = vpack.c.b16 %v799, %v791
        %v1304 = vpack.c.b16 %v800, %v792
        %v1305 = vpack.c.b16 %v809, %v801
        %v1306 = vpack.c.b16 %v810, %v802
        %v1307 = vpack.c.b16 %v811, %v803
        %v1308 = vpack.c.b16 %v812, %v804
        %v1309 = vpack.c.b16 %v813, %v805
        %v1310 = vpack.c.b16 %v814, %v806
        %v1311 = vpack.c.b16 %v815, %v807
        %v1312 = vpack.c.b16 %v816, %v808
        %v1313 = vpack.c.b16 %v825, %v817
        %v1314 = vpack.c.b16 %v826, %v818
        %v1315 = vpack.c.b16 %v827, %v819
        %v1316 = vpack.c.b16 %v828, %v820
        %v1317 = vpack.c.b16 %v829, %v821
        %v1318 = vpack.c.b16 %v830, %v822
        %v1319 = vpack.c.b16 %v831, %v823
        %v1320 = vpack.c.b16 %v832, %v824
        %v1321 = vpack.c.b16 %v841, %v833
        %v1322 = vpack.c.b16 %v842, %v834
        %v1323 = vpack.c.b16 %v843, %v835
        %v1324 = vpack.c.b16 %v844, %v836
        %v1325 = vpack.c.b16 %v845, %v837
        %v1326 = vpack.c.b16 %v846, %v838
        %v1327 = vpack.c.b16 %v847, %v839
        %v1328 = vpack.c.b16 %v848, %v840
        %v1329 = vpack.c.b16 %v857, %v849
        %v1330 = vpack.c.b16 %v858, %v850
        %v1331 = vpack.c.b16 %v859, %v851
        %v1332 = vpack.c.b16 %v860, %v852
        %v1333 = vpack.c.b16 %v861, %v853
        %v1334 = vpack.c.b16 %v862, %v854
        %v1335 = vpack.c.b16 %v863, %v855
        %v1336 = vpack.c.b16 %v864, %v856
        %v1337 = vpack.c.b16 %v873, %v865
        %v1338 = vpack.c.b16 %v874, %v866
        %v1339 = vpack.c.b16 %v875, %v867
        %v1340 = vpack.c.b16 %v876, %v868
        %v1341 = vpack.c.b16 %v877, %v869
        %v1342 = vpack.c.b16 %v878, %v870
        %v1343 = vpack.c.b16 %v879, %v871
        %v1344 = vpack.c.b16 %v880, %v872
        %v1345 = vpack.c.b16 %v889, %v881
        %v1346 = vpack.c.b16 %v890, %v882
        %v1347 = vpack.c.b16 %v891, %v883
        %v1348 = vpack.c.b16 %v892, %v884
        %v1349 = vpack.c.b16 %v893, %v885
        %v1350 = vpack.c.b16 %v894, %v886
        %v1351 = vpack.c.b16 %v895, %v887
        %v1352 = vpack.c.b16 %v896, %v888
        %v1353 = vpack.c.b16 %v905, %v897
        %v1354 = vpack.c.b16 %v906, %v898
        %v1355 = vpack.c.b16 %v907, %v899
        %v1356 = vpack.c.b16 %v908, %v900
        %v1357 = vpack.c.b16 %v909, %v901
        %v1358 = vpack.c.b16 %v910, %v902
        %v1359 = vpack.c.b16 %v911, %v903
        %v1360 = vpack.c.b16 %v912, %v904
        %v1361 = vpack.c.b16 %v921, %v913
        %v1362 = vpack.c.b16 %v922, %v914
        %v1363 = vpack.c.b16 %v923, %v915
        %v1364 = vpack.c.b16 %v924, %v916
        %v1365 = vpack.c.b16 %v925, %v917
        %v1366 = vpack.c.b16 %v926, %v918
        %v1367 = vpack.c.b16 %v927, %v919
        %v1368 = vpack.c.b16 %v928, %v920
        %v1369 = vpack.c.b16 %v937, %v929
        %v1370 = vpack.c.b16 %v938, %v930
        %v1371 = vpack.c.b16 %v939, %v931
        %v1372 = vpack.c.b16 %v940, %v932
        %v1373 = vpack.c.b16 %v941, %v933
        %v1374 = vpack.c.b16 %v942, %v934
        %v1375 = vpack.c.b16 %v943, %v935
        %v1376 = vpack.c.b16 %v944, %v936
        %v1377 = vpack.c.b16 %v953, %v945
        %v1378 = vpack.c.b16 %v954, %v946
        %v1379 = vpack.c.b16 %v955, %v947
        %v1380 = vpack.c.b16 %v956, %v948
        %v1381 = vpack.c.b16 %v957, %v949
        %v1382 = vpack.c.b16 %v958, %v950
        %v1383 = vpack.c.b16 %v959, %v951
        %v1384 = vpack.c.b16 %v960, %v952
        %v1385 = vpack.c.b16 %v969, %v961
        %v1386 = vpack.c.b16 %v970, %v962
        %v1387 = vpack.c.b16 %v971, %v963
        %v1388 = vpack.c.b16 %v972, %v964
        %v1389 = vpack.c.b16 %v973, %v965
        %v1390 = vpack.c.b16 %v974, %v966
        %v1391 = vpack.c.b16 %v975, %v967
        %v1392 = vpack.c.b16 %v976, %v968
        %v1393 = vpack.c.b16 %v985, %v977
        %v1394 = vpack.c.b16 %v986, %v978
        %v1395 = vpack.c.b16 %v987, %v979
        %v1396 = vpack.c.b16 %v988, %v980
        %v1397 = vpack.c.b16 %v989, %v981
        %v1398 = vpack.c.b16 %v990, %v982
        %v1399 = vpack.c.b16 %v991, %v983
        %v1400 = vpack.c.b16 %v992, %v984
        %v1401 = vpack.c.b16 %v1001, %v993
        %v1402 = vpack.c.b16 %v1002, %v994
        %v1403 = vpack.c.b16 %v1003, %v995
        %v1404 = vpack.c.b16 %v1004, %v996
        %v1405 = vpack.c.b16 %v1005, %v997
        %v1406 = vpack.c.b16 %v1006, %v998
        %v1407 = vpack.c.b16 %v1007, %v999
        %v1408 = vpack.c.b16 %v1008, %v1000
        %v1409 = vpack.c.b16 %v1017, %v1009
        %v1410 = vpack.c.b16 %v1018, %v1010
        %v1411 = vpack.c.b16 %v1019, %v1011
        %v1412 = vpack.c.b16 %v1020, %v1012
        %v1413 = vpack.c.b16 %v1021, %v1013
        %v1414 = vpack.c.b16 %v1022, %v1014
        %v1415 = vpack.c.b16 %v1023, %v1015
        %v1416 = vpack.c.b16 %v1024, %v1016
        %v1417 = vpack.c.b16 %v1033, %v1025
        %v1418 = vpack.c.b16 %v1034, %v1026
        %v1419 = vpack.c.b16 %v1035, %v1027
        %v1420 = vpack.c.b16 %v1036, %v1028
        %v1421 = vpack.c.b16 %v1037, %v1029
        %v1422 = vpack.c.b16 %v1038, %v1030
        %v1423 = vpack.c.b16 %v1039, %v1031
        %v1424 = vpack.c.b16 %v1040, %v1032
        %v1425 = vpack.c.b16 %v1049, %v1041
        %v1426 = vpack.c.b16 %v1050, %v1042
        %v1427 = vpack.c.b16 %v1051, %v1043
        %v1428 = vpack.c.b16 %v1052, %v1044
        %v1429 = vpack.c.b16 %v1053, %v1045
        %v1430 = vpack.c.b16 %v1054, %v1046
        %v1431 = vpack.c.b16 %v1055, %v1047
        %v1432 = vpack.c.b16 %v1056, %v1048
        %v1433 = vpack.c.b16 %v1065, %v1057
        %v1434 = vpack.c.b16 %v1066, %v1058
        %v1435 = vpack.c.b16 %v1067, %v1059
        %v1436 = vpack.c.b16 %v1068, %v1060
        %v1437 = vpack.c.b16 %v1069, %v1061
        %v1438 = vpack.c.b16 %v1070, %v1062
        %v1439 = vpack.c.b16 %v1071, %v1063
        %v1440 = vpack.c.b16 %v1072, %v1064
        %v1441 = vpack.c.b16 %v1081, %v1073
        %v1442 = vpack.c.b16 %v1082, %v1074
        %v1443 = vpack.c.b16 %v1083, %v1075
        %v1444 = vpack.c.b16 %v1084, %v1076
        %v1445 = vpack.c.b16 %v1085, %v1077
        %v1446 = vpack.c.b16 %v1086, %v1078
        %v1447 = vpack.c.b16 %v1087, %v1079
        %v1448 = vpack.c.b16 %v1088, %v1080
        %v1449 = vpack.c.b16 %v1097, %v1089
        %v1450 = vpack.c.b16 %v1098, %v1090
        %v1451 = vpack.c.b16 %v1099, %v1091
        %v1452 = vpack.c.b16 %v1100, %v1092
        %v1453 = vpack.c.b16 %v1101, %v1093
        %v1454 = vpack.c.b16 %v1102, %v1094
        %v1455 = vpack.c.b16 %v1103, %v1095
        %v1456 = vpack.c.b16 %v1104, %v1096
        %v1457 = vpack.c.b16 %v1113, %v1105
        %v1458 = vpack.c.b16 %v1114, %v1106
        %v1459 = vpack.c.b16 %v1115, %v1107
        %v1460 = vpack.c.b16 %v1116, %v1108
        %v1461 = vpack.c.b16 %v1117, %v1109
        %v1462 = vpack.c.b16 %v1118, %v1110
        %v1463 = vpack.c.b16 %v1119, %v1111
        %v1464 = vpack.c.b16 %v1120, %v1112
        %v1465 = vpack.c.b16 %v1129, %v1121
        %v1466 = vpack.c.b16 %v1130, %v1122
        %v1467 = vpack.c.b16 %v1131, %v1123
        %v1468 = vpack.c.b16 %v1132, %v1124
        %v1469 = vpack.c.b16 %v1133, %v1125
        %v1470 = vpack.c.b16 %v1134, %v1126
        %v1471 = vpack.c.b16 %v1135, %v1127
        %v1472 = vpack.c.b16 %v1136, %v1128
        %v1473 = vpack.c.b16 %v1145, %v1137
        %v1474 = vpack.c.b16 %v1146, %v1138
        %v1475 = vpack.c.b16 %v1147, %v1139
        %v1476 = vpack.c.b16 %v1148, %v1140
        %v1477 = vpack.c.b16 %v1149, %v1141
        %v1478 = vpack.c.b16 %v1150, %v1142
        %v1479 = vpack.c.b16 %v1151, %v1143
        %v1480 = vpack.c.b16 %v1152, %v1144
        %v1481 = vpack.c.b16 %v1161, %v1153
        %v1482 = vpack.c.b16 %v1162, %v1154
        %v1483 = vpack.c.b16 %v1163, %v1155
        %v1484 = vpack.c.b16 %v1164, %v1156
        %v1485 = vpack.c.b16 %v1165, %v1157
        %v1486 = vpack.c.b16 %v1166, %v1158
        %v1487 = vpack.c.b16 %v1167, %v1159
        %v1488 = vpack.c.b16 %v1168, %v1160
        %v1489 = vpack.c.b16 %v1177, %v1169
        %v1490 = vpack.c.b16 %v1178, %v1170
        %v1491 = vpack.c.b16 %v1179, %v1171
        %v1492 = vpack.c.b16 %v1180, %v1172
        %v1493 = vpack.c.b16 %v1181, %v1173
        %v1494 = vpack.c.b16 %v1182, %v1174
        %v1495 = vpack.c.b16 %v1183, %v1175
        %v1496 = vpack.c.b16 %v1184, %v1176
        %v1497 = vpack.c.b16 %v1193, %v1185
        %v1498 = vpack.c.b16 %v1194, %v1186
        %v1499 = vpack.c.b16 %v1195, %v1187
        %v1500 = vpack.c.b16 %v1196, %v1188
        %v1501 = vpack.c.b16 %v1197, %v1189
        %v1502 = vpack.c.b16 %v1198, %v1190
        %v1503 = vpack.c.b16 %v1199, %v1191
        %v1504 = vpack.c.b16 %v1200, %v1192
        %v1505 = vpack.c.b16 %v1209, %v1201
        %v1506 = vpack.c.b16 %v1210, %v1202
        %v1507 = vpack.c.b16 %v1211, %v1203
        %v1508 = vpack.c.b16 %v1212, %v1204
        %v1509 = vpack.c.b16 %v1213, %v1205
        %v1510 = vpack.c.b16 %v1214, %v1206
        %v1511 = vpack.c.b16 %v1215, %v1207
        %v1512 = vpack.c.b16 %v1216, %v1208
        %v1513 = vpack.c.b16 %v1225, %v1217
        %v1514 = vpack.c.b16 %v1226, %v1218
        %v1515 = vpack.c.b16 %v1227, %v1219
        %v1516 = vpack.c.b16 %v1228, %v1220
        %v1517 = vpack.c.b16 %v1229, %v1221
        %v1518 = vpack.c.b16 %v1230, %v1222
        %v1519 = vpack.c.b16 %v1231, %v1223
        %v1520 = vpack.c.b16 %v1232, %v1224
        %v1521 = vpack.c.b16 %v1241, %v1233
        %v1522 = vpack.c.b16 %v1242, %v1234
        %v1523 = vpack.c.b16 %v1243, %v1235
        %v1524 = vpack.c.b16 %v1244, %v1236
        %v1525 = vpack.c.b16 %v1245, %v1237
        %v1526 = vpack.c.b16 %v1246, %v1238
        %v1527 = vpack.c.b16 %v1247, %v1239
        %v1528 = vpack.c.b16 %v1248, %v1240
        %v1529 = vpack.c.b16 %v1257, %v1249
        %v1530 = vpack.c.b16 %v1258, %v1250
        %v1531 = vpack.c.b16 %v1259, %v1251
        %v1532 = vpack.c.b16 %v1260, %v1252
        %v1533 = vpack.c.b16 %v1261, %v1253
        %v1534 = vpack.c.b16 %v1262, %v1254
        %v1535 = vpack.c.b16 %v1263, %v1255
        %v1536 = vpack.c.b16 %v1264, %v1256
        %v1537 = vpack.c.b16 %v1273, %v1265
        %v1538 = vpack.c.b16 %v1274, %v1266
        %v1539 = vpack.c.b16 %v1275, %v1267
        %v1540 = vpack.c.b16 %v1276, %v1268
        %v1541 = vpack.c.b16 %v1277, %v1269
        %v1542 = vpack.c.b16 %v1278, %v1270
        %v1543 = vpack.c.b16 %v1279, %v1271
        %v1544 = vpack.c.b16 %v1280, %v1272
        %v1545 = vpack.c.b16 %v1289, %v1281
        %v1546 = vpack.c.b16 %v1290, %v1282
        %v1547 = vpack.c.b16 %v1291, %v1283
        %v1548 = vpack.c.b16 %v1292, %v1284
        %v1549 = vpack.c.b16 %v1293, %v1285
        %v1550 = vpack.c.b16 %v1294, %v1286
        %v1551 = vpack.c.b16 %v1295, %v1287
        %v1552 = vpack.c.b16 %v1296, %v1288
        %1809 = vmatprep.subr.bf16.mxu0 %v1354
        %1810 = vmatpush1.bf16.msra.mxu0 %v1353
        %1811 = vmatprep.subr.bf16.mxu0 %v1346
        %1812 = vmatpush1.bf16.msra.mxu0 %v1345
        %1813 = vmatprep.subr.bf16.mxu0 %v1338
        %1814 = vmatpush1.bf16.msra.mxu0 %v1337
        %1815 = vmatprep.subr.bf16.mxu0 %v1330
        %1816 = vmatpush1.bf16.msra.mxu0 %v1329
        %1817 = vmatprep.subr.bf16.mxu0 %v1322
        %1818 = vmatpush1.bf16.msra.mxu0 %v1321
        %1819 = vmatprep.subr.bf16.mxu0 %v1314
        %1820 = vmatpush1.bf16.msra.mxu0 %v1313
        %1821 = vmatprep.subr.bf16.mxu0 %v1306
        %1822 = vmatpush1.bf16.msra.mxu0 %v1305
        %1823 = vmatprep.subr.bf16.mxu0 %v1298
        %1824 = vmatpush1.bf16.msra.mxu0 %v1297
        %1825 = vmatprep.subr.bf16.mxu0 %v1418
        %1826 = vmatpush2.bf16.msra.mxu0 %v1417
        %1827 = vmatprep.subr.bf16.mxu0 %v1410
        %1828 = vmatpush2.bf16.msra.mxu0 %v1409
        %1829 = vmatprep.subr.bf16.mxu0 %v1402
        %1830 = vmatpush2.bf16.msra.mxu0 %v1401
        %1831 = vmatprep.subr.bf16.mxu0 %v1394
        %1832 = vmatpush2.bf16.msra.mxu0 %v1393
        %1833 = vmatprep.subr.bf16.mxu0 %v1386
        %1834 = vmatpush2.bf16.msra.mxu0 %v1385
        %1835 = vmatprep.subr.bf16.mxu0 %v1378
        %1836 = vmatpush2.bf16.msra.mxu0 %v1377
        %1837 = vmatprep.subr.bf16.mxu0 %v1370
        %1838 = vmatpush2.bf16.msra.mxu0 %v1369
        %1839 = vmatprep.subr.bf16.mxu0 %v1362
        %1840 = vmatpush2.bf16.msra.mxu0 %v1361
        %1841 = vmatprep.mubr.bf16.mxu0 %v224
        %1842 = vmatmul.mubr.bf16.gmra.mxu0 %v223
        %v1843 = vpop.f32.mrf.mxu0
        %v1844 = vadd.f32 %v492, %v1843
        %v1845 = vpop.f32.mrf.mxu0
        %v1846 = vadd.f32 %v496, %v1845
        %v1847 = vpop.f32.mrf.mxu0
        %v1848 = vpop.f32.mrf.mxu0
        %1849 = vdwg.mxu0
        %1850 = vmatprep.subr.bf16.mxu0 %v1482
        %1851 = vmatpush1.bf16.msra.mxu0 %v1481
        %1852 = vmatprep.subr.bf16.mxu0 %v1474
        %1853 = vmatpush1.bf16.msra.mxu0 %v1473
        %1854 = vmatprep.subr.bf16.mxu0 %v1466
        %1855 = vmatpush1.bf16.msra.mxu0 %v1465
        %1856 = vmatprep.subr.bf16.mxu0 %v1458
        %1857 = vmatpush1.bf16.msra.mxu0 %v1457
        %1858 = vmatprep.subr.bf16.mxu0 %v1450
        %1859 = vmatpush1.bf16.msra.mxu0 %v1449
        %1860 = vmatprep.subr.bf16.mxu0 %v1442
        %1861 = vmatpush1.bf16.msra.mxu0 %v1441
        %1862 = vmatprep.subr.bf16.mxu0 %v1434
        %1863 = vmatpush1.bf16.msra.mxu0 %v1433
        %1864 = vmatprep.subr.bf16.mxu0 %v1426
        %1865 = vmatpush1.bf16.msra.mxu0 %v1425
        %1866 = vmatprep.subr.bf16.mxu0 %v1546
        %1867 = vmatpush2.bf16.msra.mxu0 %v1545
        %1868 = vmatprep.subr.bf16.mxu0 %v1538
        %1869 = vmatpush2.bf16.msra.mxu0 %v1537
        %1870 = vmatprep.subr.bf16.mxu0 %v1530
        %1871 = vmatpush2.bf16.msra.mxu0 %v1529
        %1872 = vmatprep.subr.bf16.mxu0 %v1522
        %1873 = vmatpush2.bf16.msra.mxu0 %v1521
        %1874 = vmatprep.subr.bf16.mxu0 %v1514
        %1875 = vmatpush2.bf16.msra.mxu0 %v1513
        %1876 = vmatprep.subr.bf16.mxu0 %v1506
        %1877 = vmatpush2.bf16.msra.mxu0 %v1505
        %1878 = vmatprep.subr.bf16.mxu0 %v1498
        %1879 = vmatpush2.bf16.msra.mxu0 %v1497
        %1880 = vmatprep.subr.bf16.mxu0 %v1490
        %1881 = vmatpush2.bf16.msra.mxu0 %v1489
        %1882 = vmatprep.mubr.bf16.mxu0 %v226
        %1883 = vmatmul.mubr.bf16.gmra.mxu0 %v225
        %v1884 = vpop.f32.mrf.mxu0
        %v1885 = vadd.f32 %v1844, %v1884
        %v1886 = vpop.f32.mrf.mxu0
        %v1887 = vadd.f32 %v1846, %v1886
        %v1888 = vpop.f32.mrf.mxu0
        %v1889 = vpop.f32.mrf.mxu0
        %1890 = vdwg.mxu0
        %1891 = vmatprep.subr.bf16.mxu0 %v1356
        %1892 = vmatpush1.bf16.msra.mxu0 %v1355
        %1893 = vmatprep.subr.bf16.mxu0 %v1348
        %1894 = vmatpush1.bf16.msra.mxu0 %v1347
        %1895 = vmatprep.subr.bf16.mxu0 %v1340
        %1896 = vmatpush1.bf16.msra.mxu0 %v1339
        %1897 = vmatprep.subr.bf16.mxu0 %v1332
        %1898 = vmatpush1.bf16.msra.mxu0 %v1331
        %1899 = vmatprep.subr.bf16.mxu0 %v1324
        %1900 = vmatpush1.bf16.msra.mxu0 %v1323
        %1901 = vmatprep.subr.bf16.mxu0 %v1316
        %1902 = vmatpush1.bf16.msra.mxu0 %v1315
        %1903 = vmatprep.subr.bf16.mxu0 %v1308
        %1904 = vmatpush1.bf16.msra.mxu0 %v1307
        %1905 = vmatprep.subr.bf16.mxu0 %v1300
        %1906 = vmatpush1.bf16.msra.mxu0 %v1299
        %1907 = vmatprep.subr.bf16.mxu0 %v1420
        %1908 = vmatpush2.bf16.msra.mxu0 %v1419
        %1909 = vmatprep.subr.bf16.mxu0 %v1412
        %1910 = vmatpush2.bf16.msra.mxu0 %v1411
        %1911 = vmatprep.subr.bf16.mxu0 %v1404
        %1912 = vmatpush2.bf16.msra.mxu0 %v1403
        %1913 = vmatprep.subr.bf16.mxu0 %v1396
        %1914 = vmatpush2.bf16.msra.mxu0 %v1395
        %1915 = vmatprep.subr.bf16.mxu0 %v1388
        %1916 = vmatpush2.bf16.msra.mxu0 %v1387
        %1917 = vmatprep.subr.bf16.mxu0 %v1380
        %1918 = vmatpush2.bf16.msra.mxu0 %v1379
        %1919 = vmatprep.subr.bf16.mxu0 %v1372
        %1920 = vmatpush2.bf16.msra.mxu0 %v1371
        %1921 = vmatprep.subr.bf16.mxu0 %v1364
        %1922 = vmatpush2.bf16.msra.mxu0 %v1363
        %1923 = vmatprep.mubr.bf16.mxu0 %v224
        %1924 = vmatmul.mubr.bf16.gmra.mxu0 %v223
        %v1925 = vpop.f32.mrf.mxu0
        %v1926 = vadd.f32 %v500, %v1925
        %v1927 = vpop.f32.mrf.mxu0
        %v1928 = vadd.f32 %v504, %v1927
        %v1929 = vpop.f32.mrf.mxu0
        %v1930 = vpop.f32.mrf.mxu0
        %1931 = vdwg.mxu0
        %1932 = vmatprep.subr.bf16.mxu0 %v1484
        %1933 = vmatpush1.bf16.msra.mxu0 %v1483
        %1934 = vmatprep.subr.bf16.mxu0 %v1476
        %1935 = vmatpush1.bf16.msra.mxu0 %v1475
        %1936 = vmatprep.subr.bf16.mxu0 %v1468
        %1937 = vmatpush1.bf16.msra.mxu0 %v1467
        %1938 = vmatprep.subr.bf16.mxu0 %v1460
        %1939 = vmatpush1.bf16.msra.mxu0 %v1459
        %1940 = vmatprep.subr.bf16.mxu0 %v1452
        %1941 = vmatpush1.bf16.msra.mxu0 %v1451
        %1942 = vmatprep.subr.bf16.mxu0 %v1444
        %1943 = vmatpush1.bf16.msra.mxu0 %v1443
        %1944 = vmatprep.subr.bf16.mxu0 %v1436
        %1945 = vmatpush1.bf16.msra.mxu0 %v1435
        %1946 = vmatprep.subr.bf16.mxu0 %v1428
        %1947 = vmatpush1.bf16.msra.mxu0 %v1427
        %1948 = vmatprep.subr.bf16.mxu0 %v1548
        %1949 = vmatpush2.bf16.msra.mxu0 %v1547
        %1950 = vmatprep.subr.bf16.mxu0 %v1540
        %1951 = vmatpush2.bf16.msra.mxu0 %v1539
        %1952 = vmatprep.subr.bf16.mxu0 %v1532
        %1953 = vmatpush2.bf16.msra.mxu0 %v1531
        %1954 = vmatprep.subr.bf16.mxu0 %v1524
        %1955 = vmatpush2.bf16.msra.mxu0 %v1523
        %1956 = vmatprep.subr.bf16.mxu0 %v1516
        %1957 = vmatpush2.bf16.msra.mxu0 %v1515
        %1958 = vmatprep.subr.bf16.mxu0 %v1508
        %1959 = vmatpush2.bf16.msra.mxu0 %v1507
        %1960 = vmatprep.subr.bf16.mxu0 %v1500
        %1961 = vmatpush2.bf16.msra.mxu0 %v1499
        %1962 = vmatprep.subr.bf16.mxu0 %v1492
        %1963 = vmatpush2.bf16.msra.mxu0 %v1491
        %1964 = vmatprep.mubr.bf16.mxu0 %v226
        %1965 = vmatmul.mubr.bf16.gmra.mxu0 %v225
        %v1966 = vpop.f32.mrf.mxu0
        %v1967 = vadd.f32 %v1926, %v1966
        %v1968 = vpop.f32.mrf.mxu0
        %v1969 = vadd.f32 %v1928, %v1968
        %v1970 = vpop.f32.mrf.mxu0
        %v1971 = vpop.f32.mrf.mxu0
        %1972 = vdwg.mxu0
        %1973 = vmatprep.subr.bf16.mxu0 %v1358
        %1974 = vmatpush1.bf16.msra.mxu0 %v1357
        %1975 = vmatprep.subr.bf16.mxu0 %v1350
        %1976 = vmatpush1.bf16.msra.mxu0 %v1349
        %1977 = vmatprep.subr.bf16.mxu0 %v1342
        %1978 = vmatpush1.bf16.msra.mxu0 %v1341
        %1979 = vmatprep.subr.bf16.mxu0 %v1334
        %1980 = vmatpush1.bf16.msra.mxu0 %v1333
        %1981 = vmatprep.subr.bf16.mxu0 %v1326
        %1982 = vmatpush1.bf16.msra.mxu0 %v1325
        %1983 = vmatprep.subr.bf16.mxu0 %v1318
        %1984 = vmatpush1.bf16.msra.mxu0 %v1317
        %1985 = vmatprep.subr.bf16.mxu0 %v1310
        %1986 = vmatpush1.bf16.msra.mxu0 %v1309
        %1987 = vmatprep.subr.bf16.mxu0 %v1302
        %1988 = vmatpush1.bf16.msra.mxu0 %v1301
        %1989 = vmatprep.subr.bf16.mxu0 %v1422
        %1990 = vmatpush2.bf16.msra.mxu0 %v1421
        %1991 = vmatprep.subr.bf16.mxu0 %v1414
        %1992 = vmatpush2.bf16.msra.mxu0 %v1413
        %1993 = vmatprep.subr.bf16.mxu0 %v1406
        %1994 = vmatpush2.bf16.msra.mxu0 %v1405
        %1995 = vmatprep.subr.bf16.mxu0 %v1398
        %1996 = vmatpush2.bf16.msra.mxu0 %v1397
        %1997 = vmatprep.subr.bf16.mxu0 %v1390
        %1998 = vmatpush2.bf16.msra.mxu0 %v1389
        %1999 = vmatprep.subr.bf16.mxu0 %v1382
        %2000 = vmatpush2.bf16.msra.mxu0 %v1381
        %2001 = vmatprep.subr.bf16.mxu0 %v1374
        %2002 = vmatpush2.bf16.msra.mxu0 %v1373
        %2003 = vmatprep.subr.bf16.mxu0 %v1366
        %2004 = vmatpush2.bf16.msra.mxu0 %v1365
        %2005 = vmatprep.mubr.bf16.mxu0 %v224
        %2006 = vmatmul.mubr.bf16.gmra.mxu0 %v223
        %v2007 = vpop.f32.mrf.mxu0
        %v2008 = vadd.f32 %v508, %v2007
        %v2009 = vpop.f32.mrf.mxu0
        %v2010 = vadd.f32 %v512, %v2009
        %v2011 = vpop.f32.mrf.mxu0
        %v2012 = vpop.f32.mrf.mxu0
        %2013 = vdwg.mxu0
        %2014 = vmatprep.subr.bf16.mxu0 %v1486
        %2015 = vmatpush1.bf16.msra.mxu0 %v1485
        %2016 = vmatprep.subr.bf16.mxu0 %v1478
        %2017 = vmatpush1.bf16.msra.mxu0 %v1477
        %2018 = vmatprep.subr.bf16.mxu0 %v1470
        %2019 = vmatpush1.bf16.msra.mxu0 %v1469
        %2020 = vmatprep.subr.bf16.mxu0 %v1462
        %2021 = vmatpush1.bf16.msra.mxu0 %v1461
        %2022 = vmatprep.subr.bf16.mxu0 %v1454
        %2023 = vmatpush1.bf16.msra.mxu0 %v1453
        %2024 = vmatprep.subr.bf16.mxu0 %v1446
        %2025 = vmatpush1.bf16.msra.mxu0 %v1445
        %2026 = vmatprep.subr.bf16.mxu0 %v1438
        %2027 = vmatpush1.bf16.msra.mxu0 %v1437
        %2028 = vmatprep.subr.bf16.mxu0 %v1430
        %2029 = vmatpush1.bf16.msra.mxu0 %v1429
        %2030 = vmatprep.subr.bf16.mxu0 %v1550
        %2031 = vmatpush2.bf16.msra.mxu0 %v1549
        %2032 = vmatprep.subr.bf16.mxu0 %v1542
        %2033 = vmatpush2.bf16.msra.mxu0 %v1541
        %2034 = vmatprep.subr.bf16.mxu0 %v1534
        %2035 = vmatpush2.bf16.msra.mxu0 %v1533
        %2036 = vmatprep.subr.bf16.mxu0 %v1526
        %2037 = vmatpush2.bf16.msra.mxu0 %v1525
        %2038 = vmatprep.subr.bf16.mxu0 %v1518
        %2039 = vmatpush2.bf16.msra.mxu0 %v1517
        %2040 = vmatprep.subr.bf16.mxu0 %v1510
        %2041 = vmatpush2.bf16.msra.mxu0 %v1509
        %2042 = vmatprep.subr.bf16.mxu0 %v1502
        %2043 = vmatpush2.bf16.msra.mxu0 %v1501
        %2044 = vmatprep.subr.bf16.mxu0 %v1494
        %2045 = vmatpush2.bf16.msra.mxu0 %v1493
        %2046 = vmatprep.mubr.bf16.mxu0 %v226
        %2047 = vmatmul.mubr.bf16.gmra.mxu0 %v225
        %v2048 = vpop.f32.mrf.mxu0
        %v2049 = vadd.f32 %v2008, %v2048
        %v2050 = vpop.f32.mrf.mxu0
        %v2051 = vadd.f32 %v2010, %v2050
        %v2052 = vpop.f32.mrf.mxu0
        %v2053 = vpop.f32.mrf.mxu0
        %2054 = vdwg.mxu0
        %2055 = vmatprep.subr.bf16.mxu0 %v1360
        %2056 = vmatpush1.bf16.msra.mxu0 %v1359
        %2057 = vmatprep.subr.bf16.mxu0 %v1352
        %2058 = vmatpush1.bf16.msra.mxu0 %v1351
        %2059 = vmatprep.subr.bf16.mxu0 %v1344
        %2060 = vmatpush1.bf16.msra.mxu0 %v1343
        %2061 = vmatprep.subr.bf16.mxu0 %v1336
        %2062 = vmatpush1.bf16.msra.mxu0 %v1335
        %2063 = vmatprep.subr.bf16.mxu0 %v1328
        %2064 = vmatpush1.bf16.msra.mxu0 %v1327
        %2065 = vmatprep.subr.bf16.mxu0 %v1320
        %2066 = vmatpush1.bf16.msra.mxu0 %v1319
        %2067 = vmatprep.subr.bf16.mxu0 %v1312
        %2068 = vmatpush1.bf16.msra.mxu0 %v1311
        %2069 = vmatprep.subr.bf16.mxu0 %v1304
        %2070 = vmatpush1.bf16.msra.mxu0 %v1303
        %2071 = vmatprep.subr.bf16.mxu0 %v1424
        %2072 = vmatpush2.bf16.msra.mxu0 %v1423
        %2073 = vmatprep.subr.bf16.mxu0 %v1416
        %2074 = vmatpush2.bf16.msra.mxu0 %v1415
        %2075 = vmatprep.subr.bf16.mxu0 %v1408
        %2076 = vmatpush2.bf16.msra.mxu0 %v1407
        %2077 = vmatprep.subr.bf16.mxu0 %v1400
        %2078 = vmatpush2.bf16.msra.mxu0 %v1399
        %2079 = vmatprep.subr.bf16.mxu0 %v1392
        %2080 = vmatpush2.bf16.msra.mxu0 %v1391
        %2081 = vmatprep.subr.bf16.mxu0 %v1384
        %2082 = vmatpush2.bf16.msra.mxu0 %v1383
        %2083 = vmatprep.subr.bf16.mxu0 %v1376
        %2084 = vmatpush2.bf16.msra.mxu0 %v1375
        %2085 = vmatprep.subr.bf16.mxu0 %v1368
        %2086 = vmatpush2.bf16.msra.mxu0 %v1367
        %2087 = vmatprep.mubr.bf16.mxu0 %v224
        %2088 = vmatmul.mubr.bf16.gmra.mxu0 %v223
        %v2089 = vpop.f32.mrf.mxu0
        %v2090 = vadd.f32 %v516, %v2089
        %v2091 = vpop.f32.mrf.mxu0
        %v2092 = vadd.f32 %v520, %v2091
        %v2093 = vpop.f32.mrf.mxu0
        %v2094 = vpop.f32.mrf.mxu0
        %2095 = vdwg.mxu0
        %2096 = vmatprep.subr.bf16.mxu0 %v1488
        %2097 = vmatpush1.bf16.msra.mxu0 %v1487
        %2098 = vmatprep.subr.bf16.mxu0 %v1480
        %2099 = vmatpush1.bf16.msra.mxu0 %v1479
        %2100 = vmatprep.subr.bf16.mxu0 %v1472
        %2101 = vmatpush1.bf16.msra.mxu0 %v1471
        %2102 = vmatprep.subr.bf16.mxu0 %v1464
        %2103 = vmatpush1.bf16.msra.mxu0 %v1463
        %2104 = vmatprep.subr.bf16.mxu0 %v1456
        %2105 = vmatpush1.bf16.msra.mxu0 %v1455
        %2106 = vmatprep.subr.bf16.mxu0 %v1448
        %2107 = vmatpush1.bf16.msra.mxu0 %v1447
        %2108 = vmatprep.subr.bf16.mxu0 %v1440
        %2109 = vmatpush1.bf16.msra.mxu0 %v1439
        %2110 = vmatprep.subr.bf16.mxu0 %v1432
        %2111 = vmatpush1.bf16.msra.mxu0 %v1431
        %2112 = vmatprep.subr.bf16.mxu0 %v1552
        %2113 = vmatpush2.bf16.msra.mxu0 %v1551
        %2114 = vmatprep.subr.bf16.mxu0 %v1544
        %2115 = vmatpush2.bf16.msra.mxu0 %v1543
        %2116 = vmatprep.subr.bf16.mxu0 %v1536
        %2117 = vmatpush2.bf16.msra.mxu0 %v1535
        %2118 = vmatprep.subr.bf16.mxu0 %v1528
        %2119 = vmatpush2.bf16.msra.mxu0 %v1527
        %2120 = vmatprep.subr.bf16.mxu0 %v1520
        %2121 = vmatpush2.bf16.msra.mxu0 %v1519
        %2122 = vmatprep.subr.bf16.mxu0 %v1512
        %2123 = vmatpush2.bf16.msra.mxu0 %v1511
        %2124 = vmatprep.subr.bf16.mxu0 %v1504
        %2125 = vmatpush2.bf16.msra.mxu0 %v1503
        %2126 = vmatprep.subr.bf16.mxu0 %v1496
        %2127 = vmatpush2.bf16.msra.mxu0 %v1495
        %2128 = vmatprep.mubr.bf16.mxu0 %v226
        %2129 = vmatmul.mubr.bf16.gmra.mxu0 %v225
        %v2130 = vpop.f32.mrf.mxu0
        %v2131 = vadd.f32 %v2090, %v2130
        %v2132 = vpop.f32.mrf.mxu0
        %v2133 = vadd.f32 %v2092, %v2132
        %v2134 = vpop.f32.mrf.mxu0
        %v2135 = vpop.f32.mrf.mxu0
        %2136 = vdwg.mxu0
        %2137 = vst [vmem:[%s213] sm:$0xff] %v1885
        %2138 = vst [vmem:[%s213 + $0x8] sm:$0xff] %v1887
        %2139 = vst [vmem:[%s213 + $0x10] sm:$0xff] %v1967
        %2140 = vst [vmem:[%s213 + $0x18] sm:$0xff] %v1969
        %2141 = vst [vmem:[%s213 + $0x20] sm:$0xff] %v2049
        %2142 = vst [vmem:[%s213 + $0x28] sm:$0xff] %v2051
        %2143 = vst [vmem:[%s213 + $0x30] sm:$0xff] %v2131
        %2144 = vst [vmem:[%s213 + $0x38] sm:$0xff] %v2133
        %s2145 = sand.u32 %s97, 1
        %s2146 = scalar_lea.sflag [#allocation4], %s2145
        %s2147 = sand.u32 %s97, 1
        %s2148 = smul.addr %s2147, 64
        %s2149 = scalar_lea.vmem [#allocation8], %s2148
        // Predicated region
        $region45: #{tpu_custom_call.1} parent=31 // pred_check
          %p2150 = pneg %p107
        $region46: #{tpu_custom_call.1} parent=31 // pred_check_branch
          %2152 = sbr.rel (%p2150) target = $region48
        $region47: #{tpu_custom_call.1} parent=31 // pred_region
          %s2153 = smul.u32 8, %s21
          %s2155 = ssub.s32 1024, 1024
          %2156 = vsyncadd %s2146, %s2155
          %s2157 = smul.addr %s2153, 128
          %s2158 = scalar_lea.hbm %s3, %s2157
          %s2160 = sshll.u32 %s2149, 4
          %s2161 = int_to_ptr.vmem [resolvable:$true] %s2160
          %2163 = dma.vmem_to_hbm [thread:$0]  %s2161, 1024, %s2158, %s2146
        $region48: #{tpu_custom_call.1} parent=31 // pred_fallthru
          _
      $region32: #{tpu_custom_call.1} parent=5 // pred_fallthru
        _
      %p2164 = scmp.le.s32.totalorder 2, %s16
      // Predicated region
      $region49: #{tpu_custom_call.1} parent=5 // pred_check
        %p2165 = pneg %p2164
      $region50: #{tpu_custom_call.1} parent=5 // pred_check_branch
        %2167 = sbr.rel (%p2165) target = $region52
      $region51: #{tpu_custom_call.1} parent=5 // pred_region
        %s2168 = ssub.s32 %s16, 2
        // Predicated region
        $region53: #{tpu_custom_call.1} parent=51 // pred_check
          %p2169 = pneg %p113
        $region54: #{tpu_custom_call.1} parent=51 // pred_check_branch
          %2171 = sbr.rel (%p2169) target = $region56
        $region55: #{tpu_custom_call.1} parent=51 // pred_region
          %s2172 = sand.u32 %s98, 1
          %s2173 = scalar_lea.sflag [#allocation4], %s2172
          %s2174 = sand.u32 %s98, 1
          %s2175 = smul.addr %s2174, 64
          %s2176 = scalar_lea.vmem [#allocation8], %s2175
          %2177 = dma.done %s2173, 1024
        $region56: #{tpu_custom_call.1} parent=51 // pred_fallthru
          _
      $region52: #{tpu_custom_call.1} parent=5 // pred_fallthru
        _
    $region6: #{tpu_custom_call.1} parent=1 // loop_footer
      %s20 = sadd.s32 1, %s16
    $region7: #{tpu_custom_call.1} parent=1 // loop_footer_branch
      %15 = sbr.rel target = $region3
    $region8: #{tpu_custom_call.1} parent=1 // loop_exit
      _
    %2178 = vsyncpa [#allocation3], 1
    %s2179 = scalar_lea.sflag [#allocation3], 1
    %2180 = vsyncpa %s2179, 1
    %2181 = vsyncpa [#allocation6], 1
    %s2182 = scalar_lea.sflag [#allocation6], 1
    %2183 = vsyncpa %s2182, 1
    %2184 = vsyncpa [#allocation4], 1
    %s2185 = scalar_lea.sflag [#allocation4], 1
    %2186 = vsyncpa %s2185, 1

</llo_original>
